<compile_context>
chip_gen: v5e
topology: v5e:2x2
jax: 0.10.0
libtpu: 0.0.40
codegen_flags: <defaults>
</compile_context>

<pallas_src>
import functools

import jax
import jax.numpy as jnp
from jax.experimental import pallas as pl
from jax.experimental.pallas import tpu as pltpu

LN_EPS = 1e-5


def _round_up(n, m):
    return ((n + m - 1) // m) * m


def residual_mlp_kernel(x_ref, w1_ref, b1_ref, w2_ref, bc_ref, gamma_ref,
                        beta_ref, o_ref, *, dp, out_dim, fused_res,
                        matmul_dtype):
    """One row-tile of the fused ResidualMLP forward.

    dp        : lane-padded feature width (multiple of 128)
    out_dim   : real feature width (LayerNorm statistics use this)
    fused_res : True  -> w1_ref holds [w1 | wr] (width 2*dp), residual = z[:, dp:]
                False -> res_proj is Identity; residual = x (added in f32)
    """
    x = x_ref[...]                                    # [TM, K], original dtype
    xm = x.astype(matmul_dtype)

    # First MXU pass: fc1 (and res_proj when it is a Linear), f32 accumulation.
    z = jnp.dot(xm, w1_ref[...], preferred_element_type=jnp.float32)

    if fused_res:
        h = jnp.maximum(z[:, :dp] + b1_ref[...], 0.0)           # [TM, dp]
        res = z[:, dp:]                                          # [TM, dp], f32
    else:
        h = jnp.maximum(z + b1_ref[...], 0.0)                    # [TM, dp]
        res = x.astype(jnp.float32)                              # identity residual, f32

    # Dropout: inference mode -> identity.
    # TODO(synk): training-mode dropout (random mask + 1/(1-p) scaling) not emitted.

    # Second MXU pass: fc2.
    out = jnp.dot(h.astype(matmul_dtype), w2_ref[...],
                  preferred_element_type=jnp.float32)            # [TM, dp]

    # Padded lanes of y are exactly 0 (zero weight columns / bias lanes / x pad).
    y = res + out + bc_ref[...]                                   # [TM, dp]

    # LayerNorm over the REAL feature width, two-pass variance.
    inv_d = 1.0 / out_dim
    mean = jnp.sum(y, axis=-1, keepdims=True) * inv_d
    d = y - mean
    if dp != out_dim:
        lane = jax.lax.broadcasted_iota(jnp.int32, (1, dp), 1)
        dm = jnp.where(lane < out_dim, d, 0.0)                    # zero padded lanes
    else:
        dm = d
    var = jnp.sum(dm * dm, axis=-1, keepdims=True) * inv_d
    y_hat = d * jax.lax.rsqrt(var + LN_EPS)
    # gamma/beta are zero in padded lanes -> padded output lanes are 0.
    o_ref[...] = (y_hat * gamma_ref[...] + beta_ref[...]).astype(o_ref.dtype)


def residual_mlp(x, params, *, tile_m=1024, matmul_dtype=jnp.bfloat16,
                 out_dtype=None):
    """x: [N, in_dim].  params: dict of weights (see init_params).

    tile_m       : requested rows per grid step (clamped to the VMEM budget and
                   so that the row grid has >= 4 steps).
    matmul_dtype : dtype of MXU operands (bf16 recommended on v6e/v7x; use
                   jnp.float32 for a bit-faithful check against the reference).
    out_dtype    : output dtype (defaults to x.dtype; bf16 halves store traffic).
    """
    N, in_dim = x.shape
    out_dim = params["w1"].shape[1]
    out_dtype = x.dtype if out_dtype is None else out_dtype
    dp = _round_up(out_dim, 128)          # lane-dense (padded) feature width
    pad_d = dp - out_dim

    has_proj = "wr" in params
    assert has_proj or in_dim == out_dim, "res_proj weights required when in_dim != out_dim"

    # ---- pack / lane-pad weights; fold biases --------------------------------
    w1 = params["w1"]
    b1 = params["b1"].reshape(1, -1)
    w2 = params["w2"]
    b2 = params["b2"].reshape(1, -1)

    if has_proj:
        wr = params["wr"]
        br = params["br"].reshape(1, -1)
        w1p = jnp.pad(w1, ((0, 0), (0, pad_d)))
        wrp = jnp.pad(wr, ((0, 0), (0, pad_d)))
        w_cat = jnp.concatenate([w1p, wrp], axis=1).astype(matmul_dtype)  # [in, 2*dp]
        bc = b2 + br
        xk = x
        k_dim = in_dim
        w_width = 2 * dp
    else:
        # Identity res_proj: no eye matmul; the residual x is added in f32 inside
        # the kernel.  If out_dim isn't lane-aligned, pad x's feature axis (and
        # w1's rows) so the residual lanes line up with the padded output lanes.
        w_cat = jnp.pad(w1, ((0, pad_d), (0, pad_d))).astype(matmul_dtype)  # [dp, dp]
        bc = b2
        xk = jnp.pad(x, ((0, 0), (0, pad_d))) if pad_d else x
        k_dim = dp
        w_width = dp

    w2p = jnp.pad(w2, ((0, pad_d), (0, pad_d))).astype(matmul_dtype)        # [dp, dp]
    b1p = jnp.pad(b1, ((0, 0), (0, pad_d))).astype(jnp.float32)             # [1, dp]
    bcp = jnp.pad(bc, ((0, 0), (0, pad_d))).astype(jnp.float32)             # [1, dp]
    gp = jnp.pad(params["gamma"].reshape(1, -1),
                 ((0, 0), (0, pad_d))).astype(jnp.float32)                  # [1, dp]
    bp = jnp.pad(params["beta"].reshape(1, -1),
                 ((0, 0), (0, pad_d))).astype(jnp.float32)                  # [1, dp]

    # ---- tile_m from the real VMEM footprint (incl. f32 intermediates) -------
    row_align = 16 if jnp.dtype(matmul_dtype) == jnp.dtype(jnp.bfloat16) else 8

    try:
        vmem_cap = int(pltpu.get_tpu_info().vmem_capacity_bytes)
    except Exception:
        vmem_cap = 64 << 20                       # conservative (v7x-sized) fallback
    budget = max(min(vmem_cap - (12 << 20), 100 << 20), 32 << 20)

    x_isz = jnp.dtype(xk.dtype).itemsize
    md_isz = jnp.dtype(matmul_dtype).itemsize
    o_isz = jnp.dtype(out_dtype).itemsize

    # Resident (single-buffered) constants.
    const_bytes = (k_dim * w_width + dp * dp) * md_isz + 4 * dp * 4
    # Per-row bytes: double-buffered x/out tiles + f32 activation intermediates
    # (z, h + bf16 copy, res, out, y, y_hat) — generous estimate.
    per_row = 2 * k_dim * x_isz + 2 * dp * o_isz + (w_width + 6 * dp) * 4
    avail = budget - const_bytes - (4 << 20)
    max_rows_vmem = max(row_align, (avail // max(per_row, 1)) // row_align * row_align)

    # Keep >= 4 grid steps so both v7x TensorCores get work and the pipeline has
    # steps to overlap DMA with compute.
    max_rows_grid = max(row_align, _round_up(pl.cdiv(N, 4), row_align))

    tile_m = max(row_align, min(_round_up(int(tile_m), row_align),
                                max_rows_vmem, max_rows_grid))
    grid = (pl.cdiv(N, tile_m),)        # partial last tile handled by Pallas

    vmem_limit = int(min(max(const_bytes + tile_m * per_row + (8 << 20), 32 << 20),
                         budget))

    kernel = functools.partial(residual_mlp_kernel, dp=dp, out_dim=out_dim,
                               fused_res=has_proj, matmul_dtype=matmul_dtype)

    def run(single_buffer_consts):
        cmode = {"pipeline_mode": pl.Buffered(1)} if single_buffer_consts else {}
        const2d = lambda shape: pl.BlockSpec(shape, lambda i: (0, 0), **cmode)
        return pl.pallas_call(
            kernel,
            out_shape=jax.ShapeDtypeStruct((N, dp), out_dtype),
            grid_spec=pltpu.PrefetchScalarGridSpec(
                num_scalar_prefetch=0,
                grid=grid,
                in_specs=[
                    pl.BlockSpec((tile_m, k_dim), lambda i: (i, 0)),  # x row tile
                    const2d((k_dim, w_width)),                        # w1 | [w1|wr]
                    const2d((1, dp)),                                 # b1
                    const2d((dp, dp)),                                # w2
                    const2d((1, dp)),                                 # b2 (+ br)
                    const2d((1, dp)),                                 # ln gamma
                    const2d((1, dp)),                                 # ln beta
                ],
                out_specs=pl.BlockSpec((tile_m, dp), lambda i: (i, 0)),
            ),
            compiler_params=pltpu.CompilerParams(
                dimension_semantics=("parallel",),     # shards rows across TCs (v7x)
                vmem_limit_bytes=vmem_limit),
        )(xk, w_cat, b1p, w2p, bcp, gp, bp)

    try:
        out = run(True)
    except Exception:
        # Fallback if single-buffering constants is unsupported on this jax build.
        out = run(False)

    # Lane slice only when out_dim isn't a multiple of 128 (consumers that accept
    # a lane-padded output can use out_dim == dp and skip this copy entirely).
    return out[:, :out_dim] if pad_d else out


def init_params(key, in_dim, out_dim):
    """Deterministic synthetic init matching the shapes of ResidualMLP.__init__."""
    ks = jax.random.split(key, 6)
    s1 = 1.0 / jnp.sqrt(in_dim)
    s2 = 1.0 / jnp.sqrt(out_dim)
    p = {
        # fc1: Linear(in_dim, out_dim) -> torch weight [out_dim, in_dim];
        # stored transposed here ([in_dim, out_dim]) so x @ w matches x @ W^T.
        "w1": jax.random.uniform(ks[0], (in_dim, out_dim), jnp.float32, -s1, s1),
        "b1": jax.random.uniform(ks[1], (1, out_dim), jnp.float32, -s1, s1),
        # fc2: Linear(out_dim, out_dim)
        "w2": jax.random.uniform(ks[2], (out_dim, out_dim), jnp.float32, -s2, s2),
        "b2": jax.random.uniform(ks[3], (1, out_dim), jnp.float32, -s2, s2),
        # LayerNorm(out_dim)
        "gamma": jnp.ones((1, out_dim), jnp.float32),
        "beta": jnp.zeros((1, out_dim), jnp.float32),
    }
    if in_dim != out_dim:
        # res_proj: Linear(in_dim, out_dim); Identity() otherwise (no weights).
        p["wr"] = jax.random.uniform(ks[4], (in_dim, out_dim), jnp.float32, -s1, s1)
        p["br"] = jax.random.uniform(ks[5], (1, out_dim), jnp.float32, -s1, s1)
    return p


def residual_mlp_ref(x, p):
    h = jnp.maximum(x @ p["w1"] + p["b1"], 0.0)
    out = h @ p["w2"] + p["b2"]
    res = (x @ p["wr"] + p["br"]) if "wr" in p else x
    y = res + out
    mean = jnp.mean(y, axis=-1, keepdims=True)
    var = jnp.mean((y - mean) ** 2, axis=-1, keepdims=True)
    return (y - mean) * jax.lax.rsqrt(var + LN_EPS) * p["gamma"] + p["beta"]


if __name__ == "__main__":
    key = jax.random.PRNGKey(0)
    k_x, k_p, k_x2, k_p2 = jax.random.split(key, 4)

    # Case 1: in_dim != out_dim (res_proj is a Linear).  N is not a multiple of
    # the tile (partial last tile, no wrapper row-pad) and out_dim (32) is far
    # below the 128-lane width (exercises lane padding + masked LN variance).
    N, in_dim, out_dim = 200, 16, 32
    x = jax.random.normal(k_x, (N, in_dim), jnp.float32)
    params = init_params(k_p, in_dim, out_dim)
    ref = residual_mlp_ref(x, params)

    # 1a) f32 MXU path, small tile -> multi-step grid; tight check.
    out_f32 = jax.block_until_ready(
        residual_mlp(x, params, tile_m=64, matmul_dtype=jnp.float32))
    assert out_f32.shape == (N, out_dim)
    assert jnp.allclose(out_f32, ref, atol=1e-4, rtol=1e-4), "f32 mismatch vs reference"

    # 1b) default (bf16 MXU operands); loosened tolerance.
    out_bf16 = jax.block_until_ready(residual_mlp(x, params))
    assert out_bf16.shape == (N, out_dim)
    assert jnp.allclose(out_bf16, ref, atol=3e-2, rtol=3e-2), "bf16 mismatch vs reference"

    # Case 2: in_dim == out_dim -> res_proj = Identity(); residual added in f32
    # inside the kernel (no eye matmul), lane-padded identity path.
    N2, d2 = 100, 32
    x2 = jax.random.normal(k_x2, (N2, d2), jnp.float32)
    p2 = init_params(k_p2, d2, d2)
    ref2 = residual_mlp_ref(x2, p2)

    out2_f32 = jax.block_until_ready(
        residual_mlp(x2, p2, tile_m=64, matmul_dtype=jnp.float32))
    assert out2_f32.shape == (N2, d2)
    assert jnp.allclose(out2_f32, ref2, atol=1e-4, rtol=1e-4), "identity f32 mismatch"

    out2_bf16 = jax.block_until_ready(residual_mlp(x2, p2))
    assert out2_bf16.shape == (N2, d2)
    assert jnp.allclose(out2_bf16, ref2, atol=3e-2, rtol=3e-2), "identity bf16 mismatch"

    print("KERNEL_OK")
</pallas_src>

<mosaic_0001>
module attributes {stable_mosaic.version = 11 : i64} {
  func.func @residual_mlp_kernel(%arg0: i32, %arg1: memref<56x16xf32, #tpu.memory_space<vmem>>, %arg2: memref<16x256xf32, #tpu.memory_space<vmem>>, %arg3: memref<1x128xf32, #tpu.memory_space<vmem>>, %arg4: memref<128x128xf32, #tpu.memory_space<vmem>>, %arg5: memref<1x128xf32, #tpu.memory_space<vmem>>, %arg6: memref<1x128xf32, #tpu.memory_space<vmem>>, %arg7: memref<1x128xf32, #tpu.memory_space<vmem>>, %arg8: memref<56x128xf32, #tpu.memory_space<vmem>>) attributes {dimension_semantics = [#tpu.dimension_semantics<parallel>], iteration_bounds = array<i64: 4>, scalar_prefetch = 0 : i64, scratch_operands = 0 : i64, tpu.core_type = #tpu.core_type<tc>, window_params = [{transform_indices = @transform_0, window_bounds = array<i64: 56, 16>}, {pipeline_mode = #tpu.pipeline_mode<synchronous>, transform_indices = @transform_1, window_bounds = array<i64: 16, 256>}, {pipeline_mode = #tpu.pipeline_mode<synchronous>, transform_indices = @transform_2, window_bounds = array<i64: 1, 128>}, {pipeline_mode = #tpu.pipeline_mode<synchronous>, transform_indices = @transform_3, window_bounds = array<i64: 128, 128>}, {pipeline_mode = #tpu.pipeline_mode<synchronous>, transform_indices = @transform_4, window_bounds = array<i64: 1, 128>}, {pipeline_mode = #tpu.pipeline_mode<synchronous>, transform_indices = @transform_5, window_bounds = array<i64: 1, 128>}, {pipeline_mode = #tpu.pipeline_mode<synchronous>, transform_indices = @transform_6, window_bounds = array<i64: 1, 128>}, {transform_indices = @transform_7, window_bounds = array<i64: 56, 128>}]} {
    %c0 = arith.constant 0 : index
    %c0_0 = arith.constant 0 : index
    %0 = vector.load %arg1[%c0, %c0_0] : memref<56x16xf32, #tpu.memory_space<vmem>>, vector<56x16xf32>
    %c0_1 = arith.constant 0 : index
    %c0_2 = arith.constant 0 : index
    %1 = vector.load %arg2[%c0_1, %c0_2] : memref<16x256xf32, #tpu.memory_space<vmem>>, vector<16x256xf32>
    %cst = arith.constant dense<0.000000e+00> : vector<56x256xf32>
    %2 = tpu.matmul %0, %1, %cst {dimension_numbers = #tpu.dot_dimension_numbers<[1], [0], [0], [1], [0, 0, 1, 1], [], []>} : vector<56x16xf32>, vector<16x256xf32>, vector<56x256xf32> -> vector<56x256xf32>
    %3 = vector.extract_strided_slice %2 {offsets = [0, 0], sizes = [56, 128], strides = [1, 1]} : vector<56x256xf32> to vector<56x128xf32>
    %c0_3 = arith.constant 0 : index
    %c0_4 = arith.constant 0 : index
    %4 = vector.load %arg3[%c0_3, %c0_4] : memref<1x128xf32, #tpu.memory_space<vmem>>, vector<1x128xf32>
    %5 = vector.broadcast %4 : vector<1x128xf32> to vector<56x128xf32>
    %6 = arith.addf %3, %5 : vector<56x128xf32>
    %cst_5 = arith.constant 0.000000e+00 : f32
    %7 = vector.broadcast %cst_5 : f32 to vector<56x128xf32>
    %8 = arith.maximumf %6, %7 : vector<56x128xf32>
    %9 = vector.extract_strided_slice %2 {offsets = [0, 128], sizes = [56, 128], strides = [1, 1]} : vector<56x256xf32> to vector<56x128xf32>
    %c0_6 = arith.constant 0 : index
    %c0_7 = arith.constant 0 : index
    %10 = vector.load %arg4[%c0_6, %c0_7] : memref<128x128xf32, #tpu.memory_space<vmem>>, vector<128x128xf32>
    %cst_8 = arith.constant dense<0.000000e+00> : vector<56x128xf32>
    %11 = tpu.matmul %8, %10, %cst_8 {dimension_numbers = #tpu.dot_dimension_numbers<[1], [0], [0], [1], [0, 0, 1, 1], [], []>} : vector<56x128xf32>, vector<128x128xf32>, vector<56x128xf32> -> vector<56x128xf32>
    %12 = arith.addf %9, %11 : vector<56x128xf32>
    %c0_9 = arith.constant 0 : index
    %c0_10 = arith.constant 0 : index
    %13 = vector.load %arg5[%c0_9, %c0_10] : memref<1x128xf32, #tpu.memory_space<vmem>>, vector<1x128xf32>
    %14 = vector.broadcast %13 : vector<1x128xf32> to vector<56x128xf32>
    %15 = arith.addf %12, %14 : vector<56x128xf32>
    %cst_11 = arith.constant dense<0.000000e+00> : vector<56xf32>
    %16 = vector.multi_reduction <add>, %15, %cst_11 [1] : vector<56x128xf32> to vector<56xf32>
    %17 = vector.shape_cast %16 : vector<56xf32> to vector<56x1xf32>
    %cst_12 = arith.constant 3.125000e-02 : f32
    %18 = vector.broadcast %cst_12 : f32 to vector<56x1xf32>
    %19 = arith.mulf %17, %18 : vector<56x1xf32>
    %20 = vector.broadcast %19 : vector<56x1xf32> to vector<56x128xf32>
    %21 = arith.subf %15, %20 : vector<56x128xf32>
    %22 = tpu.iota {dimensions = array<i32: 1>} : vector<1x128xi32>
    %c32_i32 = arith.constant 32 : i32
    %23 = vector.broadcast %c32_i32 : i32 to vector<1x128xi32>
    %24 = arith.cmpi slt, %22, %23 : vector<1x128xi32>
    %cst_13 = arith.constant 0.000000e+00 : f32
    %25 = vector.shape_cast %24 : vector<1x128xi1> to vector<1x128xi1>
    %26 = vector.broadcast %25 : vector<1x128xi1> to vector<56x128xi1>
    %27 = vector.broadcast %cst_13 : f32 to vector<56x128xf32>
    %28 = arith.select %26, %21, %27 : vector<56x128xi1>, vector<56x128xf32>
    %29 = arith.mulf %28, %28 : vector<56x128xf32>
    %cst_14 = arith.constant dense<0.000000e+00> : vector<56xf32>
    %30 = vector.multi_reduction <add>, %29, %cst_14 [1] : vector<56x128xf32> to vector<56xf32>
    %31 = vector.shape_cast %30 : vector<56xf32> to vector<56x1xf32>
    %cst_15 = arith.constant 3.125000e-02 : f32
    %32 = vector.broadcast %cst_15 : f32 to vector<56x1xf32>
    %33 = arith.mulf %31, %32 : vector<56x1xf32>
    %cst_16 = arith.constant 9.99999974E-6 : f32
    %34 = vector.broadcast %cst_16 : f32 to vector<56x1xf32>
    %35 = arith.addf %33, %34 : vector<56x1xf32>
    %36 = math.rsqrt %35 : vector<56x1xf32>
    %37 = vector.broadcast %36 : vector<56x1xf32> to vector<56x128xf32>
    %38 = arith.mulf %21, %37 : vector<56x128xf32>
    %c0_17 = arith.constant 0 : index
    %c0_18 = arith.constant 0 : index
    %39 = vector.load %arg6[%c0_17, %c0_18] : memref<1x128xf32, #tpu.memory_space<vmem>>, vector<1x128xf32>
    %40 = vector.broadcast %39 : vector<1x128xf32> to vector<56x128xf32>
    %41 = arith.mulf %38, %40 : vector<56x128xf32>
    %c0_19 = arith.constant 0 : index
    %c0_20 = arith.constant 0 : index
    %42 = vector.load %arg7[%c0_19, %c0_20] : memref<1x128xf32, #tpu.memory_space<vmem>>, vector<1x128xf32>
    %43 = vector.broadcast %42 : vector<1x128xf32> to vector<56x128xf32>
    %44 = arith.addf %41, %43 : vector<56x128xf32>
    %c0_21 = arith.constant 0 : index
    %c0_22 = arith.constant 0 : index
    %45 = vector.load %arg8[%c0_21, %c0_22] : memref<56x128xf32, #tpu.memory_space<vmem>>, vector<56x128xf32>
    tpu.vector_store %arg8[%c0_21, %c0_22], %44 {strides = array<i32>} : memref<56x128xf32, #tpu.memory_space<vmem>>, vector<56x128xf32>,
    return
  }
  func.func @transform_0(%arg0: i32) -> (i32, i32) {
    %c0_i32 = arith.constant 0 : i32
    %c0_i32_0 = arith.constant 0 : i32
    return %arg0, %c0_i32 : i32, i32
  }
  func.func @transform_1(%arg0: i32) -> (i32, i32) {
    %c0_i32 = arith.constant 0 : i32
    %c0_i32_0 = arith.constant 0 : i32
    %c0_i32_1 = arith.constant 0 : i32
    return %c0_i32, %c0_i32_0 : i32, i32
  }
  func.func @transform_2(%arg0: i32) -> (i32, i32) {
    %c0_i32 = arith.constant 0 : i32
    %c0_i32_0 = arith.constant 0 : i32
    %c0_i32_1 = arith.constant 0 : i32
    return %c0_i32, %c0_i32_0 : i32, i32
  }
  func.func @transform_3(%arg0: i32) -> (i32, i32) {
    %c0_i32 = arith.constant 0 : i32
    %c0_i32_0 = arith.constant 0 : i32
    %c0_i32_1 = arith.constant 0 : i32
    return %c0_i32, %c0_i32_0 : i32, i32
  }
  func.func @transform_4(%arg0: i32) -> (i32, i32) {
    %c0_i32 = arith.constant 0 : i32
    %c0_i32_0 = arith.constant 0 : i32
    %c0_i32_1 = arith.constant 0 : i32
    return %c0_i32, %c0_i32_0 : i32, i32
  }
  func.func @transform_5(%arg0: i32) -> (i32, i32) {
    %c0_i32 = arith.constant 0 : i32
    %c0_i32_0 = arith.constant 0 : i32
    %c0_i32_1 = arith.constant 0 : i32
    return %c0_i32, %c0_i32_0 : i32, i32
  }
  func.func @transform_6(%arg0: i32) -> (i32, i32) {
    %c0_i32 = arith.constant 0 : i32
    %c0_i32_0 = arith.constant 0 : i32
    %c0_i32_1 = arith.constant 0 : i32
    return %c0_i32, %c0_i32_0 : i32, i32
  }
  func.func @transform_7(%arg0: i32) -> (i32, i32) {
    %c0_i32 = arith.constant 0 : i32
    %c0_i32_0 = arith.constant 0 : i32
    return %arg0, %c0_i32 : i32, i32
  }
}

module attributes {stable_mosaic.version = 11 : i64} {
  func.func @residual_mlp_kernel(%arg0: i32, %arg1: memref<56x16xf32, #tpu.memory_space<vmem>>, %arg2: memref<16x256xf32, #tpu.memory_space<vmem>>, %arg3: memref<1x128xf32, #tpu.memory_space<vmem>>, %arg4: memref<128x128xf32, #tpu.memory_space<vmem>>, %arg5: memref<1x128xf32, #tpu.memory_space<vmem>>, %arg6: memref<1x128xf32, #tpu.memory_space<vmem>>, %arg7: memref<1x128xf32, #tpu.memory_space<vmem>>, %arg8: memref<56x128xf32, #tpu.memory_space<vmem>>) attributes {dimension_semantics = [#tpu.dimension_semantics<parallel>], iteration_bounds = array<i64: 4>, scalar_prefetch = 0 : i64, scratch_operands = 0 : i64, tpu.core_type = #tpu.core_type<tc>, window_params = [{transform_indices = @transform_0, window_bounds = array<i64: 56, 16>}, {pipeline_mode = #tpu.pipeline_mode<synchronous>, transform_indices = @transform_1, window_bounds = array<i64: 16, 256>}, {pipeline_mode = #tpu.pipeline_mode<synchronous>, transform_indices = @transform_2, window_bounds = array<i64: 1, 128>}, {pipeline_mode = #tpu.pipeline_mode<synchronous>, transform_indices = @transform_3, window_bounds = array<i64: 128, 128>}, {pipeline_mode = #tpu.pipeline_mode<synchronous>, transform_indices = @transform_4, window_bounds = array<i64: 1, 128>}, {pipeline_mode = #tpu.pipeline_mode<synchronous>, transform_indices = @transform_5, window_bounds = array<i64: 1, 128>}, {pipeline_mode = #tpu.pipeline_mode<synchronous>, transform_indices = @transform_6, window_bounds = array<i64: 1, 128>}, {transform_indices = @transform_7, window_bounds = array<i64: 56, 128>}]} {
    %c0 = arith.constant 0 : index
    %c0_0 = arith.constant 0 : index
    %0 = vector.load %arg1[%c0, %c0_0] : memref<56x16xf32, #tpu.memory_space<vmem>>, vector<56x16xf32>
    %c0_1 = arith.constant 0 : index
    %c0_2 = arith.constant 0 : index
    %1 = vector.load %arg2[%c0_1, %c0_2] : memref<16x256xf32, #tpu.memory_space<vmem>>, vector<16x256xf32>
    %cst = arith.constant dense<0.000000e+00> : vector<56x256xf32>
    %2 = tpu.matmul %0, %1, %cst {dimension_numbers = #tpu.dot_dimension_numbers<[1], [0], [0], [1], [0, 0, 1, 1], [], []>} : vector<56x16xf32>, vector<16x256xf32>, vector<56x256xf32> -> vector<56x256xf32>
    %3 = vector.extract_strided_slice %2 {offsets = [0, 0], sizes = [56, 128], strides = [1, 1]} : vector<56x256xf32> to vector<56x128xf32>
    %c0_3 = arith.constant 0 : index
    %c0_4 = arith.constant 0 : index
    %4 = vector.load %arg3[%c0_3, %c0_4] : memref<1x128xf32, #tpu.memory_space<vmem>>, vector<1x128xf32>
    %5 = vector.broadcast %4 : vector<1x128xf32> to vector<56x128xf32>
    %6 = arith.addf %3, %5 : vector<56x128xf32>
    %cst_5 = arith.constant 0.000000e+00 : f32
    %7 = vector.broadcast %cst_5 : f32 to vector<56x128xf32>
    %8 = arith.maximumf %6, %7 : vector<56x128xf32>
    %9 = vector.extract_strided_slice %2 {offsets = [0, 128], sizes = [56, 128], strides = [1, 1]} : vector<56x256xf32> to vector<56x128xf32>
    %c0_6 = arith.constant 0 : index
    %c0_7 = arith.constant 0 : index
    %10 = vector.load %arg4[%c0_6, %c0_7] : memref<128x128xf32, #tpu.memory_space<vmem>>, vector<128x128xf32>
    %cst_8 = arith.constant dense<0.000000e+00> : vector<56x128xf32>
    %11 = tpu.matmul %8, %10, %cst_8 {dimension_numbers = #tpu.dot_dimension_numbers<[1], [0], [0], [1], [0, 0, 1, 1], [], []>} : vector<56x128xf32>, vector<128x128xf32>, vector<56x128xf32> -> vector<56x128xf32>
    %12 = arith.addf %9, %11 : vector<56x128xf32>
    %c0_9 = arith.constant 0 : index
    %c0_10 = arith.constant 0 : index
    %13 = vector.load %arg5[%c0_9, %c0_10] : memref<1x128xf32, #tpu.memory_space<vmem>>, vector<1x128xf32>
    %14 = vector.broadcast %13 : vector<1x128xf32> to vector<56x128xf32>
    %15 = arith.addf %12, %14 : vector<56x128xf32>
    %cst_11 = arith.constant dense<0.000000e+00> : vector<56xf32>
    %16 = vector.multi_reduction <add>, %15, %cst_11 [1] : vector<56x128xf32> to vector<56xf32>
    %17 = vector.shape_cast %16 : vector<56xf32> to vector<56x1xf32>
    %cst_12 = arith.constant 3.125000e-02 : f32
    %18 = vector.broadcast %cst_12 : f32 to vector<56x1xf32>
    %19 = arith.mulf %17, %18 : vector<56x1xf32>
    %20 = vector.broadcast %19 : vector<56x1xf32> to vector<56x128xf32>
    %21 = arith.subf %15, %20 : vector<56x128xf32>
    %22 = tpu.iota {dimensions = array<i32: 1>} : vector<1x128xi32>
    %c32_i32 = arith.constant 32 : i32
    %23 = vector.broadcast %c32_i32 : i32 to vector<1x128xi32>
    %24 = arith.cmpi slt, %22, %23 : vector<1x128xi32>
    %cst_13 = arith.constant 0.000000e+00 : f32
    %25 = vector.shape_cast %24 : vector<1x128xi1> to vector<1x128xi1>
    %26 = vector.broadcast %25 : vector<1x128xi1> to vector<56x128xi1>
    %27 = vector.broadcast %cst_13 : f32 to vector<56x128xf32>
    %28 = arith.select %26, %21, %27 : vector<56x128xi1>, vector<56x128xf32>
    %29 = arith.mulf %28, %28 : vector<56x128xf32>
    %cst_14 = arith.constant dense<0.000000e+00> : vector<56xf32>
    %30 = vector.multi_reduction <add>, %29, %cst_14 [1] : vector<56x128xf32> to vector<56xf32>
    %31 = vector.shape_cast %30 : vector<56xf32> to vector<56x1xf32>
    %cst_15 = arith.constant 3.125000e-02 : f32
    %32 = vector.broadcast %cst_15 : f32 to vector<56x1xf32>
    %33 = arith.mulf %31, %32 : vector<56x1xf32>
    %cst_16 = arith.constant 9.99999974E-6 : f32
    %34 = vector.broadcast %cst_16 : f32 to vector<56x1xf32>
    %35 = arith.addf %33, %34 : vector<56x1xf32>
    %36 = math.rsqrt %35 : vector<56x1xf32>
    %37 = vector.broadcast %36 : vector<56x1xf32> to vector<56x128xf32>
    %38 = arith.mulf %21, %37 : vector<56x128xf32>
    %c0_17 = arith.constant 0 : index
    %c0_18 = arith.constant 0 : index
    %39 = vector.load %arg6[%c0_17, %c0_18] : memref<1x128xf32, #tpu.memory_space<vmem>>, vector<1x128xf32>
    %40 = vector.broadcast %39 : vector<1x128xf32> to vector<56x128xf32>
    %41 = arith.mulf %38, %40 : vector<56x128xf32>
    %c0_19 = arith.constant 0 : index
    %c0_20 = arith.constant 0 : index
    %42 = vector.load %arg7[%c0_19, %c0_20] : memref<1x128xf32, #tpu.memory_space<vmem>>, vector<1x128xf32>
    %43 = vector.broadcast %42 : vector<1x128xf32> to vector<56x128xf32>
    %44 = arith.addf %41, %43 : vector<56x128xf32>
    %c0_21 = arith.constant 0 : index
    %c0_22 = arith.constant 0 : index
    %45 = vector.load %arg8[%c0_21, %c0_22] : memref<56x128xf32, #tpu.memory_space<vmem>>, vector<56x128xf32>
    tpu.vector_store %arg8[%c0_21, %c0_22], %44 {strides = array<i32>} : memref<56x128xf32, #tpu.memory_space<vmem>>, vector<56x128xf32>,
    return
  }
  func.func @transform_0(%arg0: i32) -> (i32, i32) {
    %c0_i32 = arith.constant 0 : i32
    %c0_i32_0 = arith.constant 0 : i32
    return %arg0, %c0_i32 : i32, i32
  }
  func.func @transform_1(%arg0: i32) -> (i32, i32) {
    %c0_i32 = arith.constant 0 : i32
    %c0_i32_0 = arith.constant 0 : i32
    %c0_i32_1 = arith.constant 0 : i32
    return %c0_i32, %c0_i32_0 : i32, i32
  }
  func.func @transform_2(%arg0: i32) -> (i32, i32) {
    %c0_i32 = arith.constant 0 : i32
    %c0_i32_0 = arith.constant 0 : i32
    %c0_i32_1 = arith.constant 0 : i32
    return %c0_i32, %c0_i32_0 : i32, i32
  }
  func.func @transform_3(%arg0: i32) -> (i32, i32) {
    %c0_i32 = arith.constant 0 : i32
    %c0_i32_0 = arith.constant 0 : i32
    %c0_i32_1 = arith.constant 0 : i32
    return %c0_i32, %c0_i32_0 : i32, i32
  }
  func.func @transform_4(%arg0: i32) -> (i32, i32) {
    %c0_i32 = arith.constant 0 : i32
    %c0_i32_0 = arith.constant 0 : i32
    %c0_i32_1 = arith.constant 0 : i32
    return %c0_i32, %c0_i32_0 : i32, i32
  }
  func.func @transform_5(%arg0: i32) -> (i32, i32) {
    %c0_i32 = arith.constant 0 : i32
    %c0_i32_0 = arith.constant 0 : i32
    %c0_i32_1 = arith.constant 0 : i32
    return %c0_i32, %c0_i32_0 : i32, i32
  }
  func.func @transform_6(%arg0: i32) -> (i32, i32) {
    %c0_i32 = arith.constant 0 : i32
    %c0_i32_0 = arith.constant 0 : i32
    %c0_i32_1 = arith.constant 0 : i32
    return %c0_i32, %c0_i32_0 : i32, i32
  }
  func.func @transform_7(%arg0: i32) -> (i32, i32) {
    %c0_i32 = arith.constant 0 : i32
    %c0_i32_0 = arith.constant 0 : i32
    return %arg0, %c0_i32 : i32, i32
  }
}

</mosaic_0001>

<llo_original>
// kernel: tpu_custom_call.1
$region0: #{tpu_custom_call.1}
  #allocation0 [shape = 'u32[]', space=smem, size = 0x4, offset = 0x4, fixed_abs, tag = 'smem constant byte address 0x4 - core index']
  #allocation1 [shape = 'u32[72,128]{1,0:T(1,128)}', space=vmem, size = 0x9000, scoped, tag = 'internal scratch']
  %s0 = inlined_call_operand.vmem [shape: f32[200,16], index: 0, kind: input, shape index: {}]
  %s1 = inlined_call_operand.vmem [shape: f32[16,256], index: 1, kind: input, shape index: {}]
  %s2 = inlined_call_operand.vmem [shape: f32[1,128], index: 2, kind: input, shape index: {}]
  %s3 = inlined_call_operand.vmem [shape: f32[128,128], index: 3, kind: input, shape index: {}]
  %s4 = inlined_call_operand.vmem [shape: f32[1,128], index: 4, kind: input, shape index: {}]
  %s5 = inlined_call_operand.vmem [shape: f32[1,128], index: 5, kind: input, shape index: {}]
  %s6 = inlined_call_operand.vmem [shape: f32[1,128], index: 6, kind: input, shape index: {}]
  %s7 = inlined_call_operand.hbm [shape: f32[200,128], index: 7, kind: output, shape index: {}]
  %s8 = sld [smem:[#allocation0]]
  $region61: #{tpu_custom_call.1} parent=0
    _
  %s10 = ssub.s32 1, %s8
  %s11 = scalar_select 0, %s10, %s8
  $region1: #{tpu_custom_call.1} parent=0
    #allocation2 [shape = 'u8[57344]{0}', space=vmem, size = 0xe000, scoped, tag = 'output window, operand 0']
    #allocation3 [shape = 's32[2]{0}', space=sflag, size = 0x8, scoped, tag = 'scoped memory for tpu_custom_call.1']
    %12 = vsyncpa [#allocation3], 0
    %s13 = scalar_lea.sflag [#allocation3], 1
    %14 = vsyncpa %s13, 0
    loop: start=0, step=1, limit=6
    $region2: #{tpu_custom_call.1} parent=1 // loop_pre_header
      _
    $region3: #{tpu_custom_call.1} parent=1 // loop_header
      %s16 = sphi 0, %s20
      %p17 = scmp.ge.s32.totalorder %s16, 6
      %s26 = sphi 0, %s28
      %s29 = sphi 0, %s26
      %s30 = sphi 0, %s29
      %s46 = sphi 0, %s30
      %s50 = sphi 0, %s50
      %s52 = sphi 0, %s50
      %s53 = sphi 0, %s52
      %s67 = sphi 0, %s53
      %s71 = sphi 0, %s71
      %s73 = sphi 0, %s71
      %s74 = sphi 0, %s73
      %s88 = sphi 0, %s74
      %s92 = sphi 0, %s92
      %s94 = sphi 0, %s92
      %s95 = sphi 0, %s94
      %s109 = sphi 0, %s95
      %s113 = sphi 0, %s113
      %s115 = sphi 0, %s113
      %s116 = sphi 0, %s115
      %s130 = sphi 0, %s116
      %s134 = sphi 0, %s134
      %s136 = sphi 0, %s134
      %s137 = sphi 0, %s136
      %s151 = sphi 0, %s137
      %s155 = sphi 0, %s155
      %s157 = sphi 0, %s155
      %s158 = sphi 0, %s157
      %s172 = sphi 0, %s158
      %s178 = sphi 0, %s180
      %s181 = sphi 0, %s178
      %s182 = sphi 0, %s181
      %s198 = sphi 0, %s182
    $region4: #{tpu_custom_call.1} parent=1 // loop_header_branch
      %19 = sbr.rel (%p17) target = $region8
    $region5: #{tpu_custom_call.1} parent=1 // loop_body
      %s21 = ssub.s32 %s16, 1
      %s22 = ssub.s32 %s16, 2
      %s23 = sadd.s32 %s16, 1
      %s24 = ssub.s32 %s16, %s23
      %p25 = scmp.eq.s32.totalorder %s24, 0
      %s27 = sadd.s32 %s26, 1
      %s28 = scalar_select %p25, %s26, %s27
      %p31 = pneg %p25
      %p32 = scmp.eq.s32.totalorder %s16, 3
      %p33 = por %p31, %p32
      %p34 = scmp.ne.s32.totalorder %s26, %s29
      %p35 = scmp.eq.s32.totalorder %s16, 0
      %p36 = por %p34, %p35
      %p37 = scmp.ne.s32.totalorder %s26, %s29
      %p38 = scmp.eq.s32.totalorder %s21, 3
      %p39 = por %p37, %p38
      %p40 = scmp.ne.s32.totalorder %s29, %s30
      %p41 = scmp.eq.s32.totalorder %s21, 0
      %p42 = por %p40, %p41
      %p43 = scmp.ne.s32.totalorder %s29, %s30
      %p44 = scmp.eq.s32.totalorder %s22, 3
      %p45 = por %p43, %p44
      %p47 = scmp.ne.s32.totalorder %s30, %s46
      %p48 = scmp.eq.s32.totalorder %s22, 0
      %p49 = por %p47, %p48
      %s51 = sadd.s32 %s50, 1
      %p54 = scmp.eq.s32.totalorder %s16, 3
      %p55 = scmp.ne.s32.totalorder %s50, %s52
      %p56 = scmp.eq.s32.totalorder %s16, 0
      %p57 = por %p55, %p56
      %p58 = scmp.ne.s32.totalorder %s50, %s52
      %p59 = scmp.eq.s32.totalorder %s21, 3
      %p60 = por %p58, %p59
      %p61 = scmp.ne.s32.totalorder %s52, %s53
      %p62 = scmp.eq.s32.totalorder %s21, 0
      %p63 = por %p61, %p62
      %p64 = scmp.ne.s32.totalorder %s52, %s53
      %p65 = scmp.eq.s32.totalorder %s22, 3
      %p66 = por %p64, %p65
      %p68 = scmp.ne.s32.totalorder %s53, %s67
      %p69 = scmp.eq.s32.totalorder %s22, 0
      %p70 = por %p68, %p69
      %s72 = sadd.s32 %s71, 1
      %p75 = scmp.eq.s32.totalorder %s16, 3
      %p76 = scmp.ne.s32.totalorder %s71, %s73
      %p77 = scmp.eq.s32.totalorder %s16, 0
      %p78 = por %p76, %p77
      %p79 = scmp.ne.s32.totalorder %s71, %s73
      %p80 = scmp.eq.s32.totalorder %s21, 3
      %p81 = por %p79, %p80
      %p82 = scmp.ne.s32.totalorder %s73, %s74
      %p83 = scmp.eq.s32.totalorder %s21, 0
      %p84 = por %p82, %p83
      %p85 = scmp.ne.s32.totalorder %s73, %s74
      %p86 = scmp.eq.s32.totalorder %s22, 3
      %p87 = por %p85, %p86
      %p89 = scmp.ne.s32.totalorder %s74, %s88
      %p90 = scmp.eq.s32.totalorder %s22, 0
      %p91 = por %p89, %p90
      %s93 = sadd.s32 %s92, 1
      %p96 = scmp.eq.s32.totalorder %s16, 3
      %p97 = scmp.ne.s32.totalorder %s92, %s94
      %p98 = scmp.eq.s32.totalorder %s16, 0
      %p99 = por %p97, %p98
      %p100 = scmp.ne.s32.totalorder %s92, %s94
      %p101 = scmp.eq.s32.totalorder %s21, 3
      %p102 = por %p100, %p101
      %p103 = scmp.ne.s32.totalorder %s94, %s95
      %p104 = scmp.eq.s32.totalorder %s21, 0
      %p105 = por %p103, %p104
      %p106 = scmp.ne.s32.totalorder %s94, %s95
      %p107 = scmp.eq.s32.totalorder %s22, 3
      %p108 = por %p106, %p107
      %p110 = scmp.ne.s32.totalorder %s95, %s109
      %p111 = scmp.eq.s32.totalorder %s22, 0
      %p112 = por %p110, %p111
      %s114 = sadd.s32 %s113, 1
      %p117 = scmp.eq.s32.totalorder %s16, 3
      %p118 = scmp.ne.s32.totalorder %s113, %s115
      %p119 = scmp.eq.s32.totalorder %s16, 0
      %p120 = por %p118, %p119
      %p121 = scmp.ne.s32.totalorder %s113, %s115
      %p122 = scmp.eq.s32.totalorder %s21, 3
      %p123 = por %p121, %p122
      %p124 = scmp.ne.s32.totalorder %s115, %s116
      %p125 = scmp.eq.s32.totalorder %s21, 0
      %p126 = por %p124, %p125
      %p127 = scmp.ne.s32.totalorder %s115, %s116
      %p128 = scmp.eq.s32.totalorder %s22, 3
      %p129 = por %p127, %p128
      %p131 = scmp.ne.s32.totalorder %s116, %s130
      %p132 = scmp.eq.s32.totalorder %s22, 0
      %p133 = por %p131, %p132
      %s135 = sadd.s32 %s134, 1
      %p138 = scmp.eq.s32.totalorder %s16, 3
      %p139 = scmp.ne.s32.totalorder %s134, %s136
      %p140 = scmp.eq.s32.totalorder %s16, 0
      %p141 = por %p139, %p140
      %p142 = scmp.ne.s32.totalorder %s134, %s136
      %p143 = scmp.eq.s32.totalorder %s21, 3
      %p144 = por %p142, %p143
      %p145 = scmp.ne.s32.totalorder %s136, %s137
      %p146 = scmp.eq.s32.totalorder %s21, 0
      %p147 = por %p145, %p146
      %p148 = scmp.ne.s32.totalorder %s136, %s137
      %p149 = scmp.eq.s32.totalorder %s22, 3
      %p150 = por %p148, %p149
      %p152 = scmp.ne.s32.totalorder %s137, %s151
      %p153 = scmp.eq.s32.totalorder %s22, 0
      %p154 = por %p152, %p153
      %s156 = sadd.s32 %s155, 1
      %p159 = scmp.eq.s32.totalorder %s16, 3
      %p160 = scmp.ne.s32.totalorder %s155, %s157
      %p161 = scmp.eq.s32.totalorder %s16, 0
      %p162 = por %p160, %p161
      %p163 = scmp.ne.s32.totalorder %s155, %s157
      %p164 = scmp.eq.s32.totalorder %s21, 3
      %p165 = por %p163, %p164
      %p166 = scmp.ne.s32.totalorder %s157, %s158
      %p167 = scmp.eq.s32.totalorder %s21, 0
      %p168 = por %p166, %p167
      %p169 = scmp.ne.s32.totalorder %s157, %s158
      %p170 = scmp.eq.s32.totalorder %s22, 3
      %p171 = por %p169, %p170
      %p173 = scmp.ne.s32.totalorder %s158, %s172
      %p174 = scmp.eq.s32.totalorder %s22, 0
      %p175 = por %p173, %p174
      %s176 = ssub.s32 %s16, %s23
      %p177 = scmp.eq.s32.totalorder %s176, 0
      %s179 = sadd.s32 %s178, 1
      %s180 = scalar_select %p177, %s178, %s179
      %p183 = pneg %p177
      %p184 = scmp.eq.s32.totalorder %s16, 3
      %p185 = por %p183, %p184
      %p186 = scmp.ne.s32.totalorder %s178, %s181
      %p187 = scmp.eq.s32.totalorder %s16, 0
      %p188 = por %p186, %p187
      %p189 = scmp.ne.s32.totalorder %s178, %s181
      %p190 = scmp.eq.s32.totalorder %s21, 3
      %p191 = por %p189, %p190
      %p192 = scmp.ne.s32.totalorder %s181, %s182
      %p193 = scmp.eq.s32.totalorder %s21, 0
      %p194 = por %p192, %p193
      %p195 = scmp.ne.s32.totalorder %s181, %s182
      %p196 = scmp.eq.s32.totalorder %s22, 3
      %p197 = por %p195, %p196
      %p199 = scmp.ne.s32.totalorder %s182, %s198
      %p200 = scmp.eq.s32.totalorder %s22, 0
      %p201 = por %p199, %p200
      %p202 = scmp.le.s32.totalorder 1, %s16
      %p203 = scmp.lt.s32.totalorder %s16, 5
      %p204 = pnand %p202, %p203
      %p205 = pneg %p204
      // Predicated region
      $region9: #{tpu_custom_call.1} parent=5 // pred_check
        _
      $region10: #{tpu_custom_call.1} parent=5 // pred_check_branch
        %207 = sbr.rel (%p204) target = $region12
      $region11: #{tpu_custom_call.1} parent=5 // pred_region
        %s208 = ssub.s32 %s16, 1
        // Predicated region
        $region13: #{tpu_custom_call.1} parent=11 // pred_check
          %p209 = pneg %p63
        $region14: #{tpu_custom_call.1} parent=11 // pred_check_branch
          %211 = sbr.rel (%p209) target = $region16
        $region15: #{tpu_custom_call.1} parent=11 // pred_region
          _
        $region16: #{tpu_custom_call.1} parent=11 // pred_fallthru
          _
        // Predicated region
        $region17: #{tpu_custom_call.1} parent=11 // pred_check
          %p212 = pneg %p84
        $region18: #{tpu_custom_call.1} parent=11 // pred_check_branch
          %214 = sbr.rel (%p212) target = $region20
        $region19: #{tpu_custom_call.1} parent=11 // pred_region
          _
        $region20: #{tpu_custom_call.1} parent=11 // pred_fallthru
          _
        // Predicated region
        $region21: #{tpu_custom_call.1} parent=11 // pred_check
          %p215 = pneg %p105
        $region22: #{tpu_custom_call.1} parent=11 // pred_check_branch
          %217 = sbr.rel (%p215) target = $region24
        $region23: #{tpu_custom_call.1} parent=11 // pred_region
          _
        $region24: #{tpu_custom_call.1} parent=11 // pred_fallthru
          _
        // Predicated region
        $region25: #{tpu_custom_call.1} parent=11 // pred_check
          %p218 = pneg %p126
        $region26: #{tpu_custom_call.1} parent=11 // pred_check_branch
          %220 = sbr.rel (%p218) target = $region28
        $region27: #{tpu_custom_call.1} parent=11 // pred_region
          _
        $region28: #{tpu_custom_call.1} parent=11 // pred_fallthru
          _
        // Predicated region
        $region29: #{tpu_custom_call.1} parent=11 // pred_check
          %p221 = pneg %p147
        $region30: #{tpu_custom_call.1} parent=11 // pred_check_branch
          %223 = sbr.rel (%p221) target = $region32
        $region31: #{tpu_custom_call.1} parent=11 // pred_region
          _
        $region32: #{tpu_custom_call.1} parent=11 // pred_fallthru
          _
        // Predicated region
        $region33: #{tpu_custom_call.1} parent=11 // pred_check
          %p224 = pneg %p168
        $region34: #{tpu_custom_call.1} parent=11 // pred_check_branch
          %226 = sbr.rel (%p224) target = $region36
        $region35: #{tpu_custom_call.1} parent=11 // pred_region
          _
        $region36: #{tpu_custom_call.1} parent=11 // pred_fallthru
          _
      $region12: #{tpu_custom_call.1} parent=5 // pred_fallthru
        _
      %p227 = scmp.lt.s32.totalorder %s16, 4
      // Predicated region
      $region37: #{tpu_custom_call.1} parent=5 // pred_check
        %p228 = pneg %p227
      $region38: #{tpu_custom_call.1} parent=5 // pred_check_branch
        %230 = sbr.rel (%p228) target = $region40
      $region39: #{tpu_custom_call.1} parent=5 // pred_region
        // Predicated region
        $region41: #{tpu_custom_call.1} parent=39 // pred_check
          %p231 = pneg %p36
        $region42: #{tpu_custom_call.1} parent=39 // pred_check_branch
          %233 = sbr.rel (%p231) target = $region44
        $region43: #{tpu_custom_call.1} parent=39 // pred_region
          %s234 = smul.u32 7, %s16
          %s235 = ssub.s32 25, %s234
          %p236 = scmp.lt.s32.totalorder %s235, 7
          %s237 = scalar_select %p236, %s235, 7
          %s238 = smul.u32 8, %s237
          %p239 = scmp.lt.s32.totalorder %s234, 24
          %s240 = scalar_select %p239, %s234, 24
          %s241 = smul.addr %s240, 8
          %s242 = scalar_lea.vmem %s0, %s241
          %s243 = smul.u32 7, %s16
          %s244 = ssub.s32 25, %s243
          %p245 = scmp.lt.s32.totalorder %s244, 7
          %s246 = scalar_select %p245, %s244, 7
          %s247 = smul.u32 8, %s246
        $region44: #{tpu_custom_call.1} parent=39 // pred_fallthru
          _
      $region40: #{tpu_custom_call.1} parent=5 // pred_fallthru
        _
      %p248 = scmp.le.s32.totalorder 1, %s16
      %p249 = scmp.lt.s32.totalorder %s16, 5
      %p250 = pnand %p248, %p249
      %p251 = pneg %p250
      // Predicated region
      $region45: #{tpu_custom_call.1} parent=5 // pred_check
        _
      $region46: #{tpu_custom_call.1} parent=5 // pred_check_branch
        %253 = sbr.rel (%p250) target = $region48
      $region47: #{tpu_custom_call.1} parent=5 // pred_region
        %s254 = ssub.s32 %s16, 1
        %s255 = smul.u32 7, %s21
        %s256 = ssub.s32 25, %s255
        %p257 = scmp.lt.s32.totalorder %s256, 7
        %s258 = scalar_select %p257, %s256, 7
        %s259 = smul.u32 8, %s258
        %p260 = scmp.lt.s32.totalorder %s255, 24
        %s261 = scalar_select %p260, %s255, 24
        %s262 = smul.addr %s261, 8
        %s263 = scalar_lea.vmem %s0, %s262
        %p264 = pneg %p42
        %p265 = pneg %p39
        %p266 = pneg %p63
        %p267 = pneg %p60
        %p268 = pneg %p84
        %p269 = pneg %p81
        %p270 = pneg %p105
        %p271 = pneg %p102
        %p272 = pneg %p126
        %p273 = pneg %p123
        %p274 = pneg %p147
        %p275 = pneg %p144
        %p276 = pneg %p168
        %p277 = pneg %p165
        %p278 = pneg %p194
        %p279 = pneg %p191
        %s280 = sand.u32 %s181, 1
        %s281 = scalar_lea.sflag [#allocation3], %s280
        %s282 = sand.u32 %s181, 1
        %s283 = smul.addr %s282, 56
        %s284 = scalar_lea.vmem [#allocation2], %s283
        %s285 = smul.u32 7, %s21
        %s286 = ssub.s32 25, %s285
        %p287 = scmp.lt.s32.totalorder %s286, 7
        %s288 = scalar_select %p287, %s286, 7
        %s289 = smul.u32 8, %s288
        %p290 = scmp.lt.s32.totalorder %s285, 24
        %s291 = scalar_select %p290, %s285, 24
        %s292 = smul.addr %s291, 8
        %s293 = scalar_lea.vmem %s0, %s292
        %s294 = smul.u32 7, %s21
        %s295 = ssub.s32 25, %s294
        %p296 = scmp.lt.s32.totalorder %s295, 7
        %s297 = scalar_select %p296, %s295, 7
        %s298 = smul.u32 8, %s297
        %s299 = smul.u32 7, %s21
        %s300 = ssub.s32 25, %s299
        %p301 = scmp.lt.s32.totalorder %s300, 7
        %s302 = scalar_select %p301, %s300, 7
        %s303 = smul.u32 8, %s302
        %v304 = vld [vmem:[%s293] sm:$0xff]
        %v305 = vld [vmem:[%s293 + $0x8] sm:$0xff]
        %v306 = vld [vmem:[%s293 + $0x10] sm:$0xff]
        %v307 = vld [vmem:[%s293 + $0x18] sm:$0xff]
        %v308 = vld [vmem:[%s293 + $0x20] sm:$0xff]
        %v309 = vld [vmem:[%s293 + $0x28] sm:$0xff]
        %v310 = vld [vmem:[%s293 + $0x30] sm:$0xff]
        %v311 = vld [vmem:[%s1] sm:$0xff]
        %v312 = vld [vmem:[%s1 + $0x8] sm:$0xff]
        %v313 = vld [vmem:[%s1 + $0x10] sm:$0xff]
        %v314 = vld [vmem:[%s1 + $0x18] sm:$0xff]
        %vm315 = vcmask 130048
        %v317 = vsel %vm315, %v304, 0
        %v320 = vsel %vm315, %v305, 0
        %v323 = vsel %vm315, %v306, 0
        %v326 = vsel %vm315, %v307, 0
        %v329 = vsel %vm315, %v308, 0
        %v332 = vsel %vm315, %v309, 0
        %v335 = vsel %vm315, %v310, 0
        %337 = vmatpush.msra.mxu0 0.0
        %338 = vmatpush.msra.mxu0 0.0
        %339 = vmatpush.msra.mxu0 0.0
        %340 = vmatpush.msra.mxu0 0.0
        %341 = vmatpush.msra.mxu0 0.0
        %342 = vmatpush.msra.mxu0 0.0
        %343 = vmatpush.msra.mxu0 0.0
        %344 = vmatpush.msra.mxu0 0.0
        %345 = vmatpush.msra.mxu0 0.0
        %346 = vmatpush.msra.mxu0 0.0
        %347 = vmatpush.msra.mxu0 0.0
        %348 = vmatpush.msra.mxu0 0.0
        %349 = vmatpush.msra.mxu0 0.0
        %350 = vmatpush.msra.mxu0 0.0
        %351 = vmatpush.msra.mxu0 %v313
        %352 = vmatpush.msra.mxu0 %v311
        %353 = vmatmul.f32.gmra.mxu0 %v317
        %v354 = vpop.f32.mrf.mxu0
        %v355 = vadd.f32 0.0, %v354
        %356 = vmatmul.f32.gmra.mxu0 %v320
        %v357 = vpop.f32.mrf.mxu0
        %v358 = vadd.f32 0.0, %v357
        %359 = vmatmul.f32.gmra.mxu0 %v323
        %v360 = vpop.f32.mrf.mxu0
        %v361 = vadd.f32 0.0, %v360
        %362 = vmatmul.f32.gmra.mxu0 %v326
        %v363 = vpop.f32.mrf.mxu0
        %v364 = vadd.f32 0.0, %v363
        %365 = vmatmul.f32.gmra.mxu0 %v329
        %v366 = vpop.f32.mrf.mxu0
        %v367 = vadd.f32 0.0, %v366
        %368 = vmatmul.f32.gmra.mxu0 %v332
        %v369 = vpop.f32.mrf.mxu0
        %v370 = vadd.f32 0.0, %v369
        %371 = vmatmul.f32.gmra.mxu0 %v335
        %v372 = vpop.f32.mrf.mxu0
        %v373 = vadd.f32 0.0, %v372
        %374 = vdwg.mxu0
        %375 = vmatpush.msra.mxu0 0.0
        %376 = vmatpush.msra.mxu0 0.0
        %377 = vmatpush.msra.mxu0 0.0
        %378 = vmatpush.msra.mxu0 0.0
        %379 = vmatpush.msra.mxu0 0.0
        %380 = vmatpush.msra.mxu0 0.0
        %381 = vmatpush.msra.mxu0 0.0
        %382 = vmatpush.msra.mxu0 0.0
        %383 = vmatpush.msra.mxu0 0.0
        %384 = vmatpush.msra.mxu0 0.0
        %385 = vmatpush.msra.mxu0 0.0
        %386 = vmatpush.msra.mxu0 0.0
        %387 = vmatpush.msra.mxu0 0.0
        %388 = vmatpush.msra.mxu0 0.0
        %389 = vmatpush.msra.mxu0 %v314
        %390 = vmatpush.msra.mxu0 %v312
        %391 = vmatmul.f32.gmra.mxu0 %v317
        %v392 = vpop.f32.mrf.mxu0
        %v393 = vadd.f32 0.0, %v392
        %394 = vmatmul.f32.gmra.mxu0 %v320
        %v395 = vpop.f32.mrf.mxu0
        %v396 = vadd.f32 0.0, %v395
        %397 = vmatmul.f32.gmra.mxu0 %v323
        %v398 = vpop.f32.mrf.mxu0
        %v399 = vadd.f32 0.0, %v398
        %400 = vmatmul.f32.gmra.mxu0 %v326
        %v401 = vpop.f32.mrf.mxu0
        %v402 = vadd.f32 0.0, %v401
        %403 = vmatmul.f32.gmra.mxu0 %v329
        %v404 = vpop.f32.mrf.mxu0
        %v405 = vadd.f32 0.0, %v404
        %406 = vmatmul.f32.gmra.mxu0 %v332
        %v407 = vpop.f32.mrf.mxu0
        %v408 = vadd.f32 0.0, %v407
        %409 = vmatmul.f32.gmra.mxu0 %v335
        %v410 = vpop.f32.mrf.mxu0
        %v411 = vadd.f32 0.0, %v410
        %412 = vdwg.mxu0
        %v413 = vld [vmem:[%s2] sm:$0x1]
        %v415 = vperm.slane %v413, 0
        %v417 = vadd.f32 %v355, %v415
        %v418 = vadd.f32 %v358, %v415
        %v419 = vadd.f32 %v361, %v415
        %v420 = vadd.f32 %v364, %v415
        %v421 = vadd.f32 %v367, %v415
        %v422 = vadd.f32 %v370, %v415
        %v423 = vadd.f32 %v373, %v415
        %v424 = vmax.f32 %v417, 0.0
        %v425 = vmax.f32 %v418, 0.0
        %v426 = vmax.f32 %v419, 0.0
        %v427 = vmax.f32 %v420, 0.0
        %v428 = vmax.f32 %v421, 0.0
        %v429 = vmax.f32 %v422, 0.0
        %v430 = vmax.f32 %v423, 0.0
        %v431 = vld [vmem:[%s3] sm:$0xff]
        %v432 = vld [vmem:[%s3 + $0x8] sm:$0xff]
        %v433 = vld [vmem:[%s3 + $0x10] sm:$0xff]
        %v434 = vld [vmem:[%s3 + $0x18] sm:$0xff]
        %v435 = vld [vmem:[%s3 + $0x20] sm:$0xff]
        %v436 = vld [vmem:[%s3 + $0x28] sm:$0xff]
        %v437 = vld [vmem:[%s3 + $0x30] sm:$0xff]
        %v438 = vld [vmem:[%s3 + $0x38] sm:$0xff]
        %v439 = vld [vmem:[%s3 + $0x40] sm:$0xff]
        %v440 = vld [vmem:[%s3 + $0x48] sm:$0xff]
        %v441 = vld [vmem:[%s3 + $0x50] sm:$0xff]
        %v442 = vld [vmem:[%s3 + $0x58] sm:$0xff]
        %v443 = vld [vmem:[%s3 + $0x60] sm:$0xff]
        %v444 = vld [vmem:[%s3 + $0x68] sm:$0xff]
        %v445 = vld [vmem:[%s3 + $0x70] sm:$0xff]
        %v446 = vld [vmem:[%s3 + $0x78] sm:$0xff]
        %447 = vmatpush.msra.mxu0 %v446
        %448 = vmatpush.msra.mxu0 %v445
        %449 = vmatpush.msra.mxu0 %v444
        %450 = vmatpush.msra.mxu0 %v443
        %451 = vmatpush.msra.mxu0 %v442
        %452 = vmatpush.msra.mxu0 %v441
        %453 = vmatpush.msra.mxu0 %v440
        %454 = vmatpush.msra.mxu0 %v439
        %455 = vmatpush.msra.mxu0 %v438
        %456 = vmatpush.msra.mxu0 %v437
        %457 = vmatpush.msra.mxu0 %v436
        %458 = vmatpush.msra.mxu0 %v435
        %459 = vmatpush.msra.mxu0 %v434
        %460 = vmatpush.msra.mxu0 %v433
        %461 = vmatpush.msra.mxu0 %v432
        %462 = vmatpush.msra.mxu0 %v431
        %463 = vmatmul.f32.gmra.mxu0 %v424
        %v464 = vpop.f32.mrf.mxu0
        %v465 = vadd.f32 0.0, %v464
        %466 = vmatmul.f32.gmra.mxu0 %v425
        %v467 = vpop.f32.mrf.mxu0
        %v468 = vadd.f32 0.0, %v467
        %469 = vmatmul.f32.gmra.mxu0 %v426
        %v470 = vpop.f32.mrf.mxu0
        %v471 = vadd.f32 0.0, %v470
        %472 = vmatmul.f32.gmra.mxu0 %v427
        %v473 = vpop.f32.mrf.mxu0
        %v474 = vadd.f32 0.0, %v473
        %475 = vmatmul.f32.gmra.mxu0 %v428
        %v476 = vpop.f32.mrf.mxu0
        %v477 = vadd.f32 0.0, %v476
        %478 = vmatmul.f32.gmra.mxu0 %v429
        %v479 = vpop.f32.mrf.mxu0
        %v480 = vadd.f32 0.0, %v479
        %481 = vmatmul.f32.gmra.mxu0 %v430
        %v482 = vpop.f32.mrf.mxu0
        %v483 = vadd.f32 0.0, %v482
        %484 = vdwg.mxu0
        %v485 = vadd.f32 %v393, %v465
        %v486 = vadd.f32 %v396, %v468
        %v487 = vadd.f32 %v399, %v471
        %v488 = vadd.f32 %v402, %v474
        %v489 = vadd.f32 %v405, %v477
        %v490 = vadd.f32 %v408, %v480
        %v491 = vadd.f32 %v411, %v483
        %v492 = vld [vmem:[%s4] sm:$0x1]
        %v494 = vperm.slane %v492, 0
        %v496 = vadd.f32 %v485, %v494
        %v497 = vadd.f32 %v486, %v494
        %v498 = vadd.f32 %v487, %v494
        %v499 = vadd.f32 %v488, %v494
        %v500 = vadd.f32 %v489, %v494
        %v501 = vadd.f32 %v490, %v494
        %v502 = vadd.f32 %v491, %v494
        %503 = vadd.xlane.f32.xlu0 %v496
        %v504 = vpop.xlane.xlu0 %503
        %505 = vadd.xlane.f32.xlu0 %v497
        %v506 = vpop.xlane.xlu0 %505
        %507 = vadd.xlane.f32.xlu0 %v498
        %v508 = vpop.xlane.xlu0 %507
        %509 = vadd.xlane.f32.xlu0 %v499
        %v510 = vpop.xlane.xlu0 %509
        %511 = vadd.xlane.f32.xlu0 %v500
        %v512 = vpop.xlane.xlu0 %511
        %513 = vadd.xlane.f32.xlu0 %v501
        %v514 = vpop.xlane.xlu0 %513
        %515 = vadd.xlane.f32.xlu0 %v502
        %v516 = vpop.xlane.xlu0 %515
        %v517 = vmul.f32 %v504, 0.03125
        %v518 = vmul.f32 %v506, 0.03125
        %v519 = vmul.f32 %v508, 0.03125
        %v520 = vmul.f32 %v510, 0.03125
        %v521 = vmul.f32 %v512, 0.03125
        %v522 = vmul.f32 %v514, 0.03125
        %v523 = vmul.f32 %v516, 0.03125
        %v524 = vsub.f32 %v496, %v517
        %v525 = vsub.f32 %v497, %v518
        %v526 = vsub.f32 %v498, %v519
        %v527 = vsub.f32 %v499, %v520
        %v528 = vsub.f32 %v500, %v521
        %v529 = vsub.f32 %v501, %v522
        %v530 = vsub.f32 %v502, %v523
        %v531 = vlaneseq
        %v532 = vand.u32 %v531, 127
        %vm533 = vcmp.lt.s32.totalorder %v532, 32
        %v534 = vsel %vm533, 1, 0
        %vm535 = vcmp.eq.s32.totalorder %v534, 1
        %v536 = vsel %vm535, %v524, 0.0
        %v537 = vsel %vm535, %v525, 0.0
        %v538 = vsel %vm535, %v526, 0.0
        %v539 = vsel %vm535, %v527, 0.0
        %v540 = vsel %vm535, %v528, 0.0
        %v541 = vsel %vm535, %v529, 0.0
        %v542 = vsel %vm535, %v530, 0.0
        %v543 = vmul.f32 %v536, %v536
        %v544 = vmul.f32 %v537, %v537
        %v545 = vmul.f32 %v538, %v538
        %v546 = vmul.f32 %v539, %v539
        %v547 = vmul.f32 %v540, %v540
        %v548 = vmul.f32 %v541, %v541
        %v549 = vmul.f32 %v542, %v542
        %550 = vadd.xlane.f32.xlu0 %v543
        %v551 = vpop.xlane.xlu0 %550
        %552 = vadd.xlane.f32.xlu0 %v544
        %v553 = vpop.xlane.xlu0 %552
        %554 = vadd.xlane.f32.xlu0 %v545
        %v555 = vpop.xlane.xlu0 %554
        %556 = vadd.xlane.f32.xlu0 %v546
        %v557 = vpop.xlane.xlu0 %556
        %558 = vadd.xlane.f32.xlu0 %v547
        %v559 = vpop.xlane.xlu0 %558
        %560 = vadd.xlane.f32.xlu0 %v548
        %v561 = vpop.xlane.xlu0 %560
        %562 = vadd.xlane.f32.xlu0 %v549
        %v563 = vpop.xlane.xlu0 %562
        %v564 = vmul.f32 %v551, 0.03125
        %v565 = vmul.f32 %v553, 0.03125
        %v566 = vmul.f32 %v555, 0.03125
        %v567 = vmul.f32 %v557, 0.03125
        %v568 = vmul.f32 %v559, 0.03125
        %v569 = vmul.f32 %v561, 0.03125
        %v570 = vmul.f32 %v563, 0.03125
        %v571 = vadd.f32 %v564, 1e-05
        %v572 = vadd.f32 %v565, 1e-05
        %v573 = vadd.f32 %v566, 1e-05
        %v574 = vadd.f32 %v567, 1e-05
        %v575 = vadd.f32 %v568, 1e-05
        %v576 = vadd.f32 %v569, 1e-05
        %v577 = vadd.f32 %v570, 1e-05
        %v578 = vrsqrt.pop %v571
        %v579 = vmul.f32 %v578, %v571
        %v580 = vmul.f32 %v579, %v578
        %v581 = vmul.f32 0.5, %v580
        %v582 = vsub.f32 1.5, %v581
        %v583 = vmul.f32 %v578, %v582
        %vm584 = vweird.f32 %v571
        %vm585 = vweird.f32 %v578
        %vm586 = vmor %vm584, %vm585
        %v587 = vsel %vm586, %v578, %v583
        %v588 = vrsqrt.pop %v572
        %v589 = vmul.f32 %v588, %v572
        %v590 = vmul.f32 %v589, %v588
        %v591 = vmul.f32 0.5, %v590
        %v592 = vsub.f32 1.5, %v591
        %v593 = vmul.f32 %v588, %v592
        %vm594 = vweird.f32 %v572
        %vm595 = vweird.f32 %v588
        %vm596 = vmor %vm594, %vm595
        %v597 = vsel %vm596, %v588, %v593
        %v598 = vrsqrt.pop %v573
        %v599 = vmul.f32 %v598, %v573
        %v600 = vmul.f32 %v599, %v598
        %v601 = vmul.f32 0.5, %v600
        %v602 = vsub.f32 1.5, %v601
        %v603 = vmul.f32 %v598, %v602
        %vm604 = vweird.f32 %v573
        %vm605 = vweird.f32 %v598
        %vm606 = vmor %vm604, %vm605
        %v607 = vsel %vm606, %v598, %v603
        %v608 = vrsqrt.pop %v574
        %v609 = vmul.f32 %v608, %v574
        %v610 = vmul.f32 %v609, %v608
        %v611 = vmul.f32 0.5, %v610
        %v612 = vsub.f32 1.5, %v611
        %v613 = vmul.f32 %v608, %v612
        %vm614 = vweird.f32 %v574
        %vm615 = vweird.f32 %v608
        %vm616 = vmor %vm614, %vm615
        %v617 = vsel %vm616, %v608, %v613
        %v618 = vrsqrt.pop %v575
        %v619 = vmul.f32 %v618, %v575
        %v620 = vmul.f32 %v619, %v618
        %v621 = vmul.f32 0.5, %v620
        %v622 = vsub.f32 1.5, %v621
        %v623 = vmul.f32 %v618, %v622
        %vm624 = vweird.f32 %v575
        %vm625 = vweird.f32 %v618
        %vm626 = vmor %vm624, %vm625
        %v627 = vsel %vm626, %v618, %v623
        %v628 = vrsqrt.pop %v576
        %v629 = vmul.f32 %v628, %v576
        %v630 = vmul.f32 %v629, %v628
        %v631 = vmul.f32 0.5, %v630
        %v632 = vsub.f32 1.5, %v631
        %v633 = vmul.f32 %v628, %v632
        %vm634 = vweird.f32 %v576
        %vm635 = vweird.f32 %v628
        %vm636 = vmor %vm634, %vm635
        %v637 = vsel %vm636, %v628, %v633
        %v638 = vrsqrt.pop %v577
        %v639 = vmul.f32 %v638, %v577
        %v640 = vmul.f32 %v639, %v638
        %v641 = vmul.f32 0.5, %v640
        %v642 = vsub.f32 1.5, %v641
        %v643 = vmul.f32 %v638, %v642
        %vm644 = vweird.f32 %v577
        %vm645 = vweird.f32 %v638
        %vm646 = vmor %vm644, %vm645
        %v647 = vsel %vm646, %v638, %v643
        %v648 = vmul.f32 %v524, %v587
        %v649 = vmul.f32 %v525, %v597
        %v650 = vmul.f32 %v526, %v607
        %v651 = vmul.f32 %v527, %v617
        %v652 = vmul.f32 %v528, %v627
        %v653 = vmul.f32 %v529, %v637
        %v654 = vmul.f32 %v530, %v647
        %v655 = vld [vmem:[%s5] sm:$0x1]
        %v657 = vperm.slane %v655, 0
        %v659 = vmul.f32 %v648, %v657
        %v660 = vmul.f32 %v649, %v657
        %v661 = vmul.f32 %v650, %v657
        %v662 = vmul.f32 %v651, %v657
        %v663 = vmul.f32 %v652, %v657
        %v664 = vmul.f32 %v653, %v657
        %v665 = vmul.f32 %v654, %v657
        %v666 = vld [vmem:[%s6] sm:$0x1]
        %v668 = vperm.slane %v666, 0
        %v670 = vadd.f32 %v659, %v668
        %v671 = vadd.f32 %v660, %v668
        %v672 = vadd.f32 %v661, %v668
        %v673 = vadd.f32 %v662, %v668
        %v674 = vadd.f32 %v663, %v668
        %v675 = vadd.f32 %v664, %v668
        %v676 = vadd.f32 %v665, %v668
        %677 = vst [vmem:[%s284] sm:$0xff] %v670
        %678 = vst [vmem:[%s284 + $0x8] sm:$0xff] %v671
        %679 = vst [vmem:[%s284 + $0x10] sm:$0xff] %v672
        %680 = vst [vmem:[%s284 + $0x18] sm:$0xff] %v673
        %681 = vst [vmem:[%s284 + $0x20] sm:$0xff] %v674
        %682 = vst [vmem:[%s284 + $0x28] sm:$0xff] %v675
        %683 = vst [vmem:[%s284 + $0x30] sm:$0xff] %v676
        %s684 = sand.u32 %s181, 1
        %s685 = scalar_lea.sflag [#allocation3], %s684
        %s686 = sand.u32 %s181, 1
        %s687 = smul.addr %s686, 56
        %s688 = scalar_lea.vmem [#allocation2], %s687
        // Predicated region
        $region49: #{tpu_custom_call.1} parent=47 // pred_check
          %p689 = pneg %p191
        $region50: #{tpu_custom_call.1} parent=47 // pred_check_branch
          %691 = sbr.rel (%p689) target = $region52
        $region51: #{tpu_custom_call.1} parent=47 // pred_region
          %s692 = smul.u32 7, %s21
          %s693 = ssub.s32 25, %s692
          %p694 = scmp.lt.s32.totalorder %s693, 7
          %s695 = scalar_select %p694, %s693, 7
          %s696 = smul.u32 8, %s695
          %s697 = ssub.s32 56, %s696
          %s698 = sshll.u32 %s697, 4
          %699 = vsyncadd %s685, %s698
          %p700 = scmp.ne.s32.totalorder 0, %s696
          %s701 = smul.addr %s692, 8
          %s702 = scalar_lea.hbm %s7, %s701
          %s703 = smul.u32 8, %s695
          %s704 = sshll.u32 %s688, 4
          %s705 = int_to_ptr.vmem [resolvable:$true] %s704
          %s706 = sshll.u32 %s702, 4
          %s707 = int_to_ptr.hbm [resolvable:$true] %s706
          %s708 = sshll.u32 %s703, 4
          %712 = dma.vmem_to_hbm [thread:$0]  (%p700), %s705, %s708, %s707, %s685, 128, 128, 8
        $region52: #{tpu_custom_call.1} parent=47 // pred_fallthru
          _
      $region48: #{tpu_custom_call.1} parent=5 // pred_fallthru
        _
      %p713 = scmp.le.s32.totalorder 2, %s16
      // Predicated region
      $region53: #{tpu_custom_call.1} parent=5 // pred_check
        %p714 = pneg %p713
      $region54: #{tpu_custom_call.1} parent=5 // pred_check_branch
        %716 = sbr.rel (%p714) target = $region56
      $region55: #{tpu_custom_call.1} parent=5 // pred_region
        %s717 = ssub.s32 %s16, 2
        // Predicated region
        $region57: #{tpu_custom_call.1} parent=55 // pred_check
          %p718 = pneg %p197
        $region58: #{tpu_custom_call.1} parent=55 // pred_check_branch
          %720 = sbr.rel (%p718) target = $region60
        $region59: #{tpu_custom_call.1} parent=55 // pred_region
          %s721 = sand.u32 %s182, 1
          %s722 = scalar_lea.sflag [#allocation3], %s721
          %s723 = sand.u32 %s182, 1
          %s724 = smul.addr %s723, 56
          %s725 = scalar_lea.vmem [#allocation2], %s724
          %727 = dma.done %s722, 896
        $region60: #{tpu_custom_call.1} parent=55 // pred_fallthru
          _
      $region56: #{tpu_custom_call.1} parent=5 // pred_fallthru
        _
    $region6: #{tpu_custom_call.1} parent=1 // loop_footer
      %s20 = sadd.s32 1, %s16
    $region7: #{tpu_custom_call.1} parent=1 // loop_footer_branch
      %15 = sbr.rel target = $region3
    $region8: #{tpu_custom_call.1} parent=1 // loop_exit
      _
    %728 = vsyncpa [#allocation3], 1
    %s729 = scalar_lea.sflag [#allocation3], 1
    %730 = vsyncpa %s729, 1

// kernel: tpu_custom_call.1
$region0: #{tpu_custom_call.1}
  #allocation0 [shape = 'u32[]', space=smem, size = 0x4, offset = 0x4, fixed_abs, tag = 'smem constant byte address 0x4 - core index']
  #allocation1 [shape = 'u32[72,128]{1,0:T(1,128)}', space=vmem, size = 0x9000, scoped, tag = 'internal scratch']
  %s0 = inlined_call_operand.vmem [shape: f32[200,16], index: 0, kind: input, shape index: {}]
  %s1 = inlined_call_operand.vmem [shape: f32[16,256], index: 1, kind: input, shape index: {}]
  %s2 = inlined_call_operand.vmem [shape: f32[1,128], index: 2, kind: input, shape index: {}]
  %s3 = inlined_call_operand.vmem [shape: f32[128,128], index: 3, kind: input, shape index: {}]
  %s4 = inlined_call_operand.vmem [shape: f32[1,128], index: 4, kind: input, shape index: {}]
  %s5 = inlined_call_operand.vmem [shape: f32[1,128], index: 5, kind: input, shape index: {}]
  %s6 = inlined_call_operand.vmem [shape: f32[1,128], index: 6, kind: input, shape index: {}]
  %s7 = inlined_call_operand.hbm [shape: f32[200,128], index: 7, kind: output, shape index: {}]
  %s8 = sld [smem:[#allocation0]]
  $region61: #{tpu_custom_call.1} parent=0
    _
  %s10 = ssub.s32 1, %s8
  %s11 = scalar_select 0, %s10, %s8
  $region1: #{tpu_custom_call.1} parent=0
    #allocation2 [shape = 'u8[57344]{0}', space=vmem, size = 0xe000, scoped, tag = 'output window, operand 0']
    #allocation3 [shape = 's32[2]{0}', space=sflag, size = 0x8, scoped, tag = 'scoped memory for tpu_custom_call.1']
    %12 = vsyncpa [#allocation3], 0
    %s13 = scalar_lea.sflag [#allocation3], 1
    %14 = vsyncpa %s13, 0
    loop: start=0, step=1, limit=6
    $region2: #{tpu_custom_call.1} parent=1 // loop_pre_header
      _
    $region3: #{tpu_custom_call.1} parent=1 // loop_header
      %s16 = sphi 0, %s20
      %p17 = scmp.ge.s32.totalorder %s16, 6
      %s26 = sphi 0, %s28
      %s29 = sphi 0, %s26
      %s30 = sphi 0, %s29
      %s46 = sphi 0, %s30
      %s50 = sphi 0, %s50
      %s52 = sphi 0, %s50
      %s53 = sphi 0, %s52
      %s67 = sphi 0, %s53
      %s71 = sphi 0, %s71
      %s73 = sphi 0, %s71
      %s74 = sphi 0, %s73
      %s88 = sphi 0, %s74
      %s92 = sphi 0, %s92
      %s94 = sphi 0, %s92
      %s95 = sphi 0, %s94
      %s109 = sphi 0, %s95
      %s113 = sphi 0, %s113
      %s115 = sphi 0, %s113
      %s116 = sphi 0, %s115
      %s130 = sphi 0, %s116
      %s134 = sphi 0, %s134
      %s136 = sphi 0, %s134
      %s137 = sphi 0, %s136
      %s151 = sphi 0, %s137
      %s155 = sphi 0, %s155
      %s157 = sphi 0, %s155
      %s158 = sphi 0, %s157
      %s172 = sphi 0, %s158
      %s178 = sphi 0, %s180
      %s181 = sphi 0, %s178
      %s182 = sphi 0, %s181
      %s198 = sphi 0, %s182
    $region4: #{tpu_custom_call.1} parent=1 // loop_header_branch
      %19 = sbr.rel (%p17) target = $region8
    $region5: #{tpu_custom_call.1} parent=1 // loop_body
      %s21 = ssub.s32 %s16, 1
      %s22 = ssub.s32 %s16, 2
      %s23 = sadd.s32 %s16, 1
      %s24 = ssub.s32 %s16, %s23
      %p25 = scmp.eq.s32.totalorder %s24, 0
      %s27 = sadd.s32 %s26, 1
      %s28 = scalar_select %p25, %s26, %s27
      %p31 = pneg %p25
      %p32 = scmp.eq.s32.totalorder %s16, 3
      %p33 = por %p31, %p32
      %p34 = scmp.ne.s32.totalorder %s26, %s29
      %p35 = scmp.eq.s32.totalorder %s16, 0
      %p36 = por %p34, %p35
      %p37 = scmp.ne.s32.totalorder %s26, %s29
      %p38 = scmp.eq.s32.totalorder %s21, 3
      %p39 = por %p37, %p38
      %p40 = scmp.ne.s32.totalorder %s29, %s30
      %p41 = scmp.eq.s32.totalorder %s21, 0
      %p42 = por %p40, %p41
      %p43 = scmp.ne.s32.totalorder %s29, %s30
      %p44 = scmp.eq.s32.totalorder %s22, 3
      %p45 = por %p43, %p44
      %p47 = scmp.ne.s32.totalorder %s30, %s46
      %p48 = scmp.eq.s32.totalorder %s22, 0
      %p49 = por %p47, %p48
      %s51 = sadd.s32 %s50, 1
      %p54 = scmp.eq.s32.totalorder %s16, 3
      %p55 = scmp.ne.s32.totalorder %s50, %s52
      %p56 = scmp.eq.s32.totalorder %s16, 0
      %p57 = por %p55, %p56
      %p58 = scmp.ne.s32.totalorder %s50, %s52
      %p59 = scmp.eq.s32.totalorder %s21, 3
      %p60 = por %p58, %p59
      %p61 = scmp.ne.s32.totalorder %s52, %s53
      %p62 = scmp.eq.s32.totalorder %s21, 0
      %p63 = por %p61, %p62
      %p64 = scmp.ne.s32.totalorder %s52, %s53
      %p65 = scmp.eq.s32.totalorder %s22, 3
      %p66 = por %p64, %p65
      %p68 = scmp.ne.s32.totalorder %s53, %s67
      %p69 = scmp.eq.s32.totalorder %s22, 0
      %p70 = por %p68, %p69
      %s72 = sadd.s32 %s71, 1
      %p75 = scmp.eq.s32.totalorder %s16, 3
      %p76 = scmp.ne.s32.totalorder %s71, %s73
      %p77 = scmp.eq.s32.totalorder %s16, 0
      %p78 = por %p76, %p77
      %p79 = scmp.ne.s32.totalorder %s71, %s73
      %p80 = scmp.eq.s32.totalorder %s21, 3
      %p81 = por %p79, %p80
      %p82 = scmp.ne.s32.totalorder %s73, %s74
      %p83 = scmp.eq.s32.totalorder %s21, 0
      %p84 = por %p82, %p83
      %p85 = scmp.ne.s32.totalorder %s73, %s74
      %p86 = scmp.eq.s32.totalorder %s22, 3
      %p87 = por %p85, %p86
      %p89 = scmp.ne.s32.totalorder %s74, %s88
      %p90 = scmp.eq.s32.totalorder %s22, 0
      %p91 = por %p89, %p90
      %s93 = sadd.s32 %s92, 1
      %p96 = scmp.eq.s32.totalorder %s16, 3
      %p97 = scmp.ne.s32.totalorder %s92, %s94
      %p98 = scmp.eq.s32.totalorder %s16, 0
      %p99 = por %p97, %p98
      %p100 = scmp.ne.s32.totalorder %s92, %s94
      %p101 = scmp.eq.s32.totalorder %s21, 3
      %p102 = por %p100, %p101
      %p103 = scmp.ne.s32.totalorder %s94, %s95
      %p104 = scmp.eq.s32.totalorder %s21, 0
      %p105 = por %p103, %p104
      %p106 = scmp.ne.s32.totalorder %s94, %s95
      %p107 = scmp.eq.s32.totalorder %s22, 3
      %p108 = por %p106, %p107
      %p110 = scmp.ne.s32.totalorder %s95, %s109
      %p111 = scmp.eq.s32.totalorder %s22, 0
      %p112 = por %p110, %p111
      %s114 = sadd.s32 %s113, 1
      %p117 = scmp.eq.s32.totalorder %s16, 3
      %p118 = scmp.ne.s32.totalorder %s113, %s115
      %p119 = scmp.eq.s32.totalorder %s16, 0
      %p120 = por %p118, %p119
      %p121 = scmp.ne.s32.totalorder %s113, %s115
      %p122 = scmp.eq.s32.totalorder %s21, 3
      %p123 = por %p121, %p122
      %p124 = scmp.ne.s32.totalorder %s115, %s116
      %p125 = scmp.eq.s32.totalorder %s21, 0
      %p126 = por %p124, %p125
      %p127 = scmp.ne.s32.totalorder %s115, %s116
      %p128 = scmp.eq.s32.totalorder %s22, 3
      %p129 = por %p127, %p128
      %p131 = scmp.ne.s32.totalorder %s116, %s130
      %p132 = scmp.eq.s32.totalorder %s22, 0
      %p133 = por %p131, %p132
      %s135 = sadd.s32 %s134, 1
      %p138 = scmp.eq.s32.totalorder %s16, 3
      %p139 = scmp.ne.s32.totalorder %s134, %s136
      %p140 = scmp.eq.s32.totalorder %s16, 0
      %p141 = por %p139, %p140
      %p142 = scmp.ne.s32.totalorder %s134, %s136
      %p143 = scmp.eq.s32.totalorder %s21, 3
      %p144 = por %p142, %p143
      %p145 = scmp.ne.s32.totalorder %s136, %s137
      %p146 = scmp.eq.s32.totalorder %s21, 0
      %p147 = por %p145, %p146
      %p148 = scmp.ne.s32.totalorder %s136, %s137
      %p149 = scmp.eq.s32.totalorder %s22, 3
      %p150 = por %p148, %p149
      %p152 = scmp.ne.s32.totalorder %s137, %s151
      %p153 = scmp.eq.s32.totalorder %s22, 0
      %p154 = por %p152, %p153
      %s156 = sadd.s32 %s155, 1
      %p159 = scmp.eq.s32.totalorder %s16, 3
      %p160 = scmp.ne.s32.totalorder %s155, %s157
      %p161 = scmp.eq.s32.totalorder %s16, 0
      %p162 = por %p160, %p161
      %p163 = scmp.ne.s32.totalorder %s155, %s157
      %p164 = scmp.eq.s32.totalorder %s21, 3
      %p165 = por %p163, %p164
      %p166 = scmp.ne.s32.totalorder %s157, %s158
      %p167 = scmp.eq.s32.totalorder %s21, 0
      %p168 = por %p166, %p167
      %p169 = scmp.ne.s32.totalorder %s157, %s158
      %p170 = scmp.eq.s32.totalorder %s22, 3
      %p171 = por %p169, %p170
      %p173 = scmp.ne.s32.totalorder %s158, %s172
      %p174 = scmp.eq.s32.totalorder %s22, 0
      %p175 = por %p173, %p174
      %s176 = ssub.s32 %s16, %s23
      %p177 = scmp.eq.s32.totalorder %s176, 0
      %s179 = sadd.s32 %s178, 1
      %s180 = scalar_select %p177, %s178, %s179
      %p183 = pneg %p177
      %p184 = scmp.eq.s32.totalorder %s16, 3
      %p185 = por %p183, %p184
      %p186 = scmp.ne.s32.totalorder %s178, %s181
      %p187 = scmp.eq.s32.totalorder %s16, 0
      %p188 = por %p186, %p187
      %p189 = scmp.ne.s32.totalorder %s178, %s181
      %p190 = scmp.eq.s32.totalorder %s21, 3
      %p191 = por %p189, %p190
      %p192 = scmp.ne.s32.totalorder %s181, %s182
      %p193 = scmp.eq.s32.totalorder %s21, 0
      %p194 = por %p192, %p193
      %p195 = scmp.ne.s32.totalorder %s181, %s182
      %p196 = scmp.eq.s32.totalorder %s22, 3
      %p197 = por %p195, %p196
      %p199 = scmp.ne.s32.totalorder %s182, %s198
      %p200 = scmp.eq.s32.totalorder %s22, 0
      %p201 = por %p199, %p200
      %p202 = scmp.le.s32.totalorder 1, %s16
      %p203 = scmp.lt.s32.totalorder %s16, 5
      %p204 = pnand %p202, %p203
      %p205 = pneg %p204
      // Predicated region
      $region9: #{tpu_custom_call.1} parent=5 // pred_check
        _
      $region10: #{tpu_custom_call.1} parent=5 // pred_check_branch
        %207 = sbr.rel (%p204) target = $region12
      $region11: #{tpu_custom_call.1} parent=5 // pred_region
        %s208 = ssub.s32 %s16, 1
        // Predicated region
        $region13: #{tpu_custom_call.1} parent=11 // pred_check
          %p209 = pneg %p63
        $region14: #{tpu_custom_call.1} parent=11 // pred_check_branch
          %211 = sbr.rel (%p209) target = $region16
        $region15: #{tpu_custom_call.1} parent=11 // pred_region
          _
        $region16: #{tpu_custom_call.1} parent=11 // pred_fallthru
          _
        // Predicated region
        $region17: #{tpu_custom_call.1} parent=11 // pred_check
          %p212 = pneg %p84
        $region18: #{tpu_custom_call.1} parent=11 // pred_check_branch
          %214 = sbr.rel (%p212) target = $region20
        $region19: #{tpu_custom_call.1} parent=11 // pred_region
          _
        $region20: #{tpu_custom_call.1} parent=11 // pred_fallthru
          _
        // Predicated region
        $region21: #{tpu_custom_call.1} parent=11 // pred_check
          %p215 = pneg %p105
        $region22: #{tpu_custom_call.1} parent=11 // pred_check_branch
          %217 = sbr.rel (%p215) target = $region24
        $region23: #{tpu_custom_call.1} parent=11 // pred_region
          _
        $region24: #{tpu_custom_call.1} parent=11 // pred_fallthru
          _
        // Predicated region
        $region25: #{tpu_custom_call.1} parent=11 // pred_check
          %p218 = pneg %p126
        $region26: #{tpu_custom_call.1} parent=11 // pred_check_branch
          %220 = sbr.rel (%p218) target = $region28
        $region27: #{tpu_custom_call.1} parent=11 // pred_region
          _
        $region28: #{tpu_custom_call.1} parent=11 // pred_fallthru
          _
        // Predicated region
        $region29: #{tpu_custom_call.1} parent=11 // pred_check
          %p221 = pneg %p147
        $region30: #{tpu_custom_call.1} parent=11 // pred_check_branch
          %223 = sbr.rel (%p221) target = $region32
        $region31: #{tpu_custom_call.1} parent=11 // pred_region
          _
        $region32: #{tpu_custom_call.1} parent=11 // pred_fallthru
          _
        // Predicated region
        $region33: #{tpu_custom_call.1} parent=11 // pred_check
          %p224 = pneg %p168
        $region34: #{tpu_custom_call.1} parent=11 // pred_check_branch
          %226 = sbr.rel (%p224) target = $region36
        $region35: #{tpu_custom_call.1} parent=11 // pred_region
          _
        $region36: #{tpu_custom_call.1} parent=11 // pred_fallthru
          _
      $region12: #{tpu_custom_call.1} parent=5 // pred_fallthru
        _
      %p227 = scmp.lt.s32.totalorder %s16, 4
      // Predicated region
      $region37: #{tpu_custom_call.1} parent=5 // pred_check
        %p228 = pneg %p227
      $region38: #{tpu_custom_call.1} parent=5 // pred_check_branch
        %230 = sbr.rel (%p228) target = $region40
      $region39: #{tpu_custom_call.1} parent=5 // pred_region
        // Predicated region
        $region41: #{tpu_custom_call.1} parent=39 // pred_check
          %p231 = pneg %p36
        $region42: #{tpu_custom_call.1} parent=39 // pred_check_branch
          %233 = sbr.rel (%p231) target = $region44
        $region43: #{tpu_custom_call.1} parent=39 // pred_region
          %s234 = smul.u32 7, %s16
          %s235 = ssub.s32 25, %s234
          %p236 = scmp.lt.s32.totalorder %s235, 7
          %s237 = scalar_select %p236, %s235, 7
          %s238 = smul.u32 8, %s237
          %p239 = scmp.lt.s32.totalorder %s234, 24
          %s240 = scalar_select %p239, %s234, 24
          %s241 = smul.addr %s240, 8
          %s242 = scalar_lea.vmem %s0, %s241
          %s243 = smul.u32 7, %s16
          %s244 = ssub.s32 25, %s243
          %p245 = scmp.lt.s32.totalorder %s244, 7
          %s246 = scalar_select %p245, %s244, 7
          %s247 = smul.u32 8, %s246
        $region44: #{tpu_custom_call.1} parent=39 // pred_fallthru
          _
      $region40: #{tpu_custom_call.1} parent=5 // pred_fallthru
        _
      %p248 = scmp.le.s32.totalorder 1, %s16
      %p249 = scmp.lt.s32.totalorder %s16, 5
      %p250 = pnand %p248, %p249
      %p251 = pneg %p250
      // Predicated region
      $region45: #{tpu_custom_call.1} parent=5 // pred_check
        _
      $region46: #{tpu_custom_call.1} parent=5 // pred_check_branch
        %253 = sbr.rel (%p250) target = $region48
      $region47: #{tpu_custom_call.1} parent=5 // pred_region
        %s254 = ssub.s32 %s16, 1
        %s255 = smul.u32 7, %s21
        %s256 = ssub.s32 25, %s255
        %p257 = scmp.lt.s32.totalorder %s256, 7
        %s258 = scalar_select %p257, %s256, 7
        %s259 = smul.u32 8, %s258
        %p260 = scmp.lt.s32.totalorder %s255, 24
        %s261 = scalar_select %p260, %s255, 24
        %s262 = smul.addr %s261, 8
        %s263 = scalar_lea.vmem %s0, %s262
        %p264 = pneg %p42
        %p265 = pneg %p39
        %p266 = pneg %p63
        %p267 = pneg %p60
        %p268 = pneg %p84
        %p269 = pneg %p81
        %p270 = pneg %p105
        %p271 = pneg %p102
        %p272 = pneg %p126
        %p273 = pneg %p123
        %p274 = pneg %p147
        %p275 = pneg %p144
        %p276 = pneg %p168
        %p277 = pneg %p165
        %p278 = pneg %p194
        %p279 = pneg %p191
        %s280 = sand.u32 %s181, 1
        %s281 = scalar_lea.sflag [#allocation3], %s280
        %s282 = sand.u32 %s181, 1
        %s283 = smul.addr %s282, 56
        %s284 = scalar_lea.vmem [#allocation2], %s283
        %s285 = smul.u32 7, %s21
        %s286 = ssub.s32 25, %s285
        %p287 = scmp.lt.s32.totalorder %s286, 7
        %s288 = scalar_select %p287, %s286, 7
        %s289 = smul.u32 8, %s288
        %p290 = scmp.lt.s32.totalorder %s285, 24
        %s291 = scalar_select %p290, %s285, 24
        %s292 = smul.addr %s291, 8
        %s293 = scalar_lea.vmem %s0, %s292
        %s294 = smul.u32 7, %s21
        %s295 = ssub.s32 25, %s294
        %p296 = scmp.lt.s32.totalorder %s295, 7
        %s297 = scalar_select %p296, %s295, 7
        %s298 = smul.u32 8, %s297
        %s299 = smul.u32 7, %s21
        %s300 = ssub.s32 25, %s299
        %p301 = scmp.lt.s32.totalorder %s300, 7
        %s302 = scalar_select %p301, %s300, 7
        %s303 = smul.u32 8, %s302
        %v304 = vld [vmem:[%s293] sm:$0xff]
        %v305 = vld [vmem:[%s293 + $0x8] sm:$0xff]
        %v306 = vld [vmem:[%s293 + $0x10] sm:$0xff]
        %v307 = vld [vmem:[%s293 + $0x18] sm:$0xff]
        %v308 = vld [vmem:[%s293 + $0x20] sm:$0xff]
        %v309 = vld [vmem:[%s293 + $0x28] sm:$0xff]
        %v310 = vld [vmem:[%s293 + $0x30] sm:$0xff]
        %v311 = vld [vmem:[%s1] sm:$0xff]
        %v312 = vld [vmem:[%s1 + $0x8] sm:$0xff]
        %v313 = vld [vmem:[%s1 + $0x10] sm:$0xff]
        %v314 = vld [vmem:[%s1 + $0x18] sm:$0xff]
        %vm315 = vcmask 130048
        %v317 = vsel %vm315, %v304, 0
        %v320 = vsel %vm315, %v305, 0
        %v323 = vsel %vm315, %v306, 0
        %v326 = vsel %vm315, %v307, 0
        %v329 = vsel %vm315, %v308, 0
        %v332 = vsel %vm315, %v309, 0
        %v335 = vsel %vm315, %v310, 0
        %337 = vmatpush.msra.mxu0 0.0
        %338 = vmatpush.msra.mxu0 0.0
        %339 = vmatpush.msra.mxu0 0.0
        %340 = vmatpush.msra.mxu0 0.0
        %341 = vmatpush.msra.mxu0 0.0
        %342 = vmatpush.msra.mxu0 0.0
        %343 = vmatpush.msra.mxu0 0.0
        %344 = vmatpush.msra.mxu0 0.0
        %345 = vmatpush.msra.mxu0 0.0
        %346 = vmatpush.msra.mxu0 0.0
        %347 = vmatpush.msra.mxu0 0.0
        %348 = vmatpush.msra.mxu0 0.0
        %349 = vmatpush.msra.mxu0 0.0
        %350 = vmatpush.msra.mxu0 0.0
        %351 = vmatpush.msra.mxu0 %v313
        %352 = vmatpush.msra.mxu0 %v311
        %353 = vmatmul.f32.gmra.mxu0 %v317
        %v354 = vpop.f32.mrf.mxu0
        %v355 = vadd.f32 0.0, %v354
        %356 = vmatmul.f32.gmra.mxu0 %v320
        %v357 = vpop.f32.mrf.mxu0
        %v358 = vadd.f32 0.0, %v357
        %359 = vmatmul.f32.gmra.mxu0 %v323
        %v360 = vpop.f32.mrf.mxu0
        %v361 = vadd.f32 0.0, %v360
        %362 = vmatmul.f32.gmra.mxu0 %v326
        %v363 = vpop.f32.mrf.mxu0
        %v364 = vadd.f32 0.0, %v363
        %365 = vmatmul.f32.gmra.mxu0 %v329
        %v366 = vpop.f32.mrf.mxu0
        %v367 = vadd.f32 0.0, %v366
        %368 = vmatmul.f32.gmra.mxu0 %v332
        %v369 = vpop.f32.mrf.mxu0
        %v370 = vadd.f32 0.0, %v369
        %371 = vmatmul.f32.gmra.mxu0 %v335
        %v372 = vpop.f32.mrf.mxu0
        %v373 = vadd.f32 0.0, %v372
        %374 = vdwg.mxu0
        %375 = vmatpush.msra.mxu0 0.0
        %376 = vmatpush.msra.mxu0 0.0
        %377 = vmatpush.msra.mxu0 0.0
        %378 = vmatpush.msra.mxu0 0.0
        %379 = vmatpush.msra.mxu0 0.0
        %380 = vmatpush.msra.mxu0 0.0
        %381 = vmatpush.msra.mxu0 0.0
        %382 = vmatpush.msra.mxu0 0.0
        %383 = vmatpush.msra.mxu0 0.0
        %384 = vmatpush.msra.mxu0 0.0
        %385 = vmatpush.msra.mxu0 0.0
        %386 = vmatpush.msra.mxu0 0.0
        %387 = vmatpush.msra.mxu0 0.0
        %388 = vmatpush.msra.mxu0 0.0
        %389 = vmatpush.msra.mxu0 %v314
        %390 = vmatpush.msra.mxu0 %v312
        %391 = vmatmul.f32.gmra.mxu0 %v317
        %v392 = vpop.f32.mrf.mxu0
        %v393 = vadd.f32 0.0, %v392
        %394 = vmatmul.f32.gmra.mxu0 %v320
        %v395 = vpop.f32.mrf.mxu0
        %v396 = vadd.f32 0.0, %v395
        %397 = vmatmul.f32.gmra.mxu0 %v323
        %v398 = vpop.f32.mrf.mxu0
        %v399 = vadd.f32 0.0, %v398
        %400 = vmatmul.f32.gmra.mxu0 %v326
        %v401 = vpop.f32.mrf.mxu0
        %v402 = vadd.f32 0.0, %v401
        %403 = vmatmul.f32.gmra.mxu0 %v329
        %v404 = vpop.f32.mrf.mxu0
        %v405 = vadd.f32 0.0, %v404
        %406 = vmatmul.f32.gmra.mxu0 %v332
        %v407 = vpop.f32.mrf.mxu0
        %v408 = vadd.f32 0.0, %v407
        %409 = vmatmul.f32.gmra.mxu0 %v335
        %v410 = vpop.f32.mrf.mxu0
        %v411 = vadd.f32 0.0, %v410
        %412 = vdwg.mxu0
        %v413 = vld [vmem:[%s2] sm:$0x1]
        %v415 = vperm.slane %v413, 0
        %v417 = vadd.f32 %v355, %v415
        %v418 = vadd.f32 %v358, %v415
        %v419 = vadd.f32 %v361, %v415
        %v420 = vadd.f32 %v364, %v415
        %v421 = vadd.f32 %v367, %v415
        %v422 = vadd.f32 %v370, %v415
        %v423 = vadd.f32 %v373, %v415
        %v424 = vmax.f32 %v417, 0.0
        %v425 = vmax.f32 %v418, 0.0
        %v426 = vmax.f32 %v419, 0.0
        %v427 = vmax.f32 %v420, 0.0
        %v428 = vmax.f32 %v421, 0.0
        %v429 = vmax.f32 %v422, 0.0
        %v430 = vmax.f32 %v423, 0.0
        %v431 = vld [vmem:[%s3] sm:$0xff]
        %v432 = vld [vmem:[%s3 + $0x8] sm:$0xff]
        %v433 = vld [vmem:[%s3 + $0x10] sm:$0xff]
        %v434 = vld [vmem:[%s3 + $0x18] sm:$0xff]
        %v435 = vld [vmem:[%s3 + $0x20] sm:$0xff]
        %v436 = vld [vmem:[%s3 + $0x28] sm:$0xff]
        %v437 = vld [vmem:[%s3 + $0x30] sm:$0xff]
        %v438 = vld [vmem:[%s3 + $0x38] sm:$0xff]
        %v439 = vld [vmem:[%s3 + $0x40] sm:$0xff]
        %v440 = vld [vmem:[%s3 + $0x48] sm:$0xff]
        %v441 = vld [vmem:[%s3 + $0x50] sm:$0xff]
        %v442 = vld [vmem:[%s3 + $0x58] sm:$0xff]
        %v443 = vld [vmem:[%s3 + $0x60] sm:$0xff]
        %v444 = vld [vmem:[%s3 + $0x68] sm:$0xff]
        %v445 = vld [vmem:[%s3 + $0x70] sm:$0xff]
        %v446 = vld [vmem:[%s3 + $0x78] sm:$0xff]
        %447 = vmatpush.msra.mxu0 %v446
        %448 = vmatpush.msra.mxu0 %v445
        %449 = vmatpush.msra.mxu0 %v444
        %450 = vmatpush.msra.mxu0 %v443
        %451 = vmatpush.msra.mxu0 %v442
        %452 = vmatpush.msra.mxu0 %v441
        %453 = vmatpush.msra.mxu0 %v440
        %454 = vmatpush.msra.mxu0 %v439
        %455 = vmatpush.msra.mxu0 %v438
        %456 = vmatpush.msra.mxu0 %v437
        %457 = vmatpush.msra.mxu0 %v436
        %458 = vmatpush.msra.mxu0 %v435
        %459 = vmatpush.msra.mxu0 %v434
        %460 = vmatpush.msra.mxu0 %v433
        %461 = vmatpush.msra.mxu0 %v432
        %462 = vmatpush.msra.mxu0 %v431
        %463 = vmatmul.f32.gmra.mxu0 %v424
        %v464 = vpop.f32.mrf.mxu0
        %v465 = vadd.f32 0.0, %v464
        %466 = vmatmul.f32.gmra.mxu0 %v425
        %v467 = vpop.f32.mrf.mxu0
        %v468 = vadd.f32 0.0, %v467
        %469 = vmatmul.f32.gmra.mxu0 %v426
        %v470 = vpop.f32.mrf.mxu0
        %v471 = vadd.f32 0.0, %v470
        %472 = vmatmul.f32.gmra.mxu0 %v427
        %v473 = vpop.f32.mrf.mxu0
        %v474 = vadd.f32 0.0, %v473
        %475 = vmatmul.f32.gmra.mxu0 %v428
        %v476 = vpop.f32.mrf.mxu0
        %v477 = vadd.f32 0.0, %v476
        %478 = vmatmul.f32.gmra.mxu0 %v429
        %v479 = vpop.f32.mrf.mxu0
        %v480 = vadd.f32 0.0, %v479
        %481 = vmatmul.f32.gmra.mxu0 %v430
        %v482 = vpop.f32.mrf.mxu0
        %v483 = vadd.f32 0.0, %v482
        %484 = vdwg.mxu0
        %v485 = vadd.f32 %v393, %v465
        %v486 = vadd.f32 %v396, %v468
        %v487 = vadd.f32 %v399, %v471
        %v488 = vadd.f32 %v402, %v474
        %v489 = vadd.f32 %v405, %v477
        %v490 = vadd.f32 %v408, %v480
        %v491 = vadd.f32 %v411, %v483
        %v492 = vld [vmem:[%s4] sm:$0x1]
        %v494 = vperm.slane %v492, 0
        %v496 = vadd.f32 %v485, %v494
        %v497 = vadd.f32 %v486, %v494
        %v498 = vadd.f32 %v487, %v494
        %v499 = vadd.f32 %v488, %v494
        %v500 = vadd.f32 %v489, %v494
        %v501 = vadd.f32 %v490, %v494
        %v502 = vadd.f32 %v491, %v494
        %503 = vadd.xlane.f32.xlu0 %v496
        %v504 = vpop.xlane.xlu0 %503
        %505 = vadd.xlane.f32.xlu0 %v497
        %v506 = vpop.xlane.xlu0 %505
        %507 = vadd.xlane.f32.xlu0 %v498
        %v508 = vpop.xlane.xlu0 %507
        %509 = vadd.xlane.f32.xlu0 %v499
        %v510 = vpop.xlane.xlu0 %509
        %511 = vadd.xlane.f32.xlu0 %v500
        %v512 = vpop.xlane.xlu0 %511
        %513 = vadd.xlane.f32.xlu0 %v501
        %v514 = vpop.xlane.xlu0 %513
        %515 = vadd.xlane.f32.xlu0 %v502
        %v516 = vpop.xlane.xlu0 %515
        %v517 = vmul.f32 %v504, 0.03125
        %v518 = vmul.f32 %v506, 0.03125
        %v519 = vmul.f32 %v508, 0.03125
        %v520 = vmul.f32 %v510, 0.03125
        %v521 = vmul.f32 %v512, 0.03125
        %v522 = vmul.f32 %v514, 0.03125
        %v523 = vmul.f32 %v516, 0.03125
        %v524 = vsub.f32 %v496, %v517
        %v525 = vsub.f32 %v497, %v518
        %v526 = vsub.f32 %v498, %v519
        %v527 = vsub.f32 %v499, %v520
        %v528 = vsub.f32 %v500, %v521
        %v529 = vsub.f32 %v501, %v522
        %v530 = vsub.f32 %v502, %v523
        %v531 = vlaneseq
        %v532 = vand.u32 %v531, 127
        %vm533 = vcmp.lt.s32.totalorder %v532, 32
        %v534 = vsel %vm533, 1, 0
        %vm535 = vcmp.eq.s32.totalorder %v534, 1
        %v536 = vsel %vm535, %v524, 0.0
        %v537 = vsel %vm535, %v525, 0.0
        %v538 = vsel %vm535, %v526, 0.0
        %v539 = vsel %vm535, %v527, 0.0
        %v540 = vsel %vm535, %v528, 0.0
        %v541 = vsel %vm535, %v529, 0.0
        %v542 = vsel %vm535, %v530, 0.0
        %v543 = vmul.f32 %v536, %v536
        %v544 = vmul.f32 %v537, %v537
        %v545 = vmul.f32 %v538, %v538
        %v546 = vmul.f32 %v539, %v539
        %v547 = vmul.f32 %v540, %v540
        %v548 = vmul.f32 %v541, %v541
        %v549 = vmul.f32 %v542, %v542
        %550 = vadd.xlane.f32.xlu0 %v543
        %v551 = vpop.xlane.xlu0 %550
        %552 = vadd.xlane.f32.xlu0 %v544
        %v553 = vpop.xlane.xlu0 %552
        %554 = vadd.xlane.f32.xlu0 %v545
        %v555 = vpop.xlane.xlu0 %554
        %556 = vadd.xlane.f32.xlu0 %v546
        %v557 = vpop.xlane.xlu0 %556
        %558 = vadd.xlane.f32.xlu0 %v547
        %v559 = vpop.xlane.xlu0 %558
        %560 = vadd.xlane.f32.xlu0 %v548
        %v561 = vpop.xlane.xlu0 %560
        %562 = vadd.xlane.f32.xlu0 %v549
        %v563 = vpop.xlane.xlu0 %562
        %v564 = vmul.f32 %v551, 0.03125
        %v565 = vmul.f32 %v553, 0.03125
        %v566 = vmul.f32 %v555, 0.03125
        %v567 = vmul.f32 %v557, 0.03125
        %v568 = vmul.f32 %v559, 0.03125
        %v569 = vmul.f32 %v561, 0.03125
        %v570 = vmul.f32 %v563, 0.03125
        %v571 = vadd.f32 %v564, 1e-05
        %v572 = vadd.f32 %v565, 1e-05
        %v573 = vadd.f32 %v566, 1e-05
        %v574 = vadd.f32 %v567, 1e-05
        %v575 = vadd.f32 %v568, 1e-05
        %v576 = vadd.f32 %v569, 1e-05
        %v577 = vadd.f32 %v570, 1e-05
        %v578 = vrsqrt.pop %v571
        %v579 = vmul.f32 %v578, %v571
        %v580 = vmul.f32 %v579, %v578
        %v581 = vmul.f32 0.5, %v580
        %v582 = vsub.f32 1.5, %v581
        %v583 = vmul.f32 %v578, %v582
        %vm584 = vweird.f32 %v571
        %vm585 = vweird.f32 %v578
        %vm586 = vmor %vm584, %vm585
        %v587 = vsel %vm586, %v578, %v583
        %v588 = vrsqrt.pop %v572
        %v589 = vmul.f32 %v588, %v572
        %v590 = vmul.f32 %v589, %v588
        %v591 = vmul.f32 0.5, %v590
        %v592 = vsub.f32 1.5, %v591
        %v593 = vmul.f32 %v588, %v592
        %vm594 = vweird.f32 %v572
        %vm595 = vweird.f32 %v588
        %vm596 = vmor %vm594, %vm595
        %v597 = vsel %vm596, %v588, %v593
        %v598 = vrsqrt.pop %v573
        %v599 = vmul.f32 %v598, %v573
        %v600 = vmul.f32 %v599, %v598
        %v601 = vmul.f32 0.5, %v600
        %v602 = vsub.f32 1.5, %v601
        %v603 = vmul.f32 %v598, %v602
        %vm604 = vweird.f32 %v573
        %vm605 = vweird.f32 %v598
        %vm606 = vmor %vm604, %vm605
        %v607 = vsel %vm606, %v598, %v603
        %v608 = vrsqrt.pop %v574
        %v609 = vmul.f32 %v608, %v574
        %v610 = vmul.f32 %v609, %v608
        %v611 = vmul.f32 0.5, %v610
        %v612 = vsub.f32 1.5, %v611
        %v613 = vmul.f32 %v608, %v612
        %vm614 = vweird.f32 %v574
        %vm615 = vweird.f32 %v608
        %vm616 = vmor %vm614, %vm615
        %v617 = vsel %vm616, %v608, %v613
        %v618 = vrsqrt.pop %v575
        %v619 = vmul.f32 %v618, %v575
        %v620 = vmul.f32 %v619, %v618
        %v621 = vmul.f32 0.5, %v620
        %v622 = vsub.f32 1.5, %v621
        %v623 = vmul.f32 %v618, %v622
        %vm624 = vweird.f32 %v575
        %vm625 = vweird.f32 %v618
        %vm626 = vmor %vm624, %vm625
        %v627 = vsel %vm626, %v618, %v623
        %v628 = vrsqrt.pop %v576
        %v629 = vmul.f32 %v628, %v576
        %v630 = vmul.f32 %v629, %v628
        %v631 = vmul.f32 0.5, %v630
        %v632 = vsub.f32 1.5, %v631
        %v633 = vmul.f32 %v628, %v632
        %vm634 = vweird.f32 %v576
        %vm635 = vweird.f32 %v628
        %vm636 = vmor %vm634, %vm635
        %v637 = vsel %vm636, %v628, %v633
        %v638 = vrsqrt.pop %v577
        %v639 = vmul.f32 %v638, %v577
        %v640 = vmul.f32 %v639, %v638
        %v641 = vmul.f32 0.5, %v640
        %v642 = vsub.f32 1.5, %v641
        %v643 = vmul.f32 %v638, %v642
        %vm644 = vweird.f32 %v577
        %vm645 = vweird.f32 %v638
        %vm646 = vmor %vm644, %vm645
        %v647 = vsel %vm646, %v638, %v643
        %v648 = vmul.f32 %v524, %v587
        %v649 = vmul.f32 %v525, %v597
        %v650 = vmul.f32 %v526, %v607
        %v651 = vmul.f32 %v527, %v617
        %v652 = vmul.f32 %v528, %v627
        %v653 = vmul.f32 %v529, %v637
        %v654 = vmul.f32 %v530, %v647
        %v655 = vld [vmem:[%s5] sm:$0x1]
        %v657 = vperm.slane %v655, 0
        %v659 = vmul.f32 %v648, %v657
        %v660 = vmul.f32 %v649, %v657
        %v661 = vmul.f32 %v650, %v657
        %v662 = vmul.f32 %v651, %v657
        %v663 = vmul.f32 %v652, %v657
        %v664 = vmul.f32 %v653, %v657
        %v665 = vmul.f32 %v654, %v657
        %v666 = vld [vmem:[%s6] sm:$0x1]
        %v668 = vperm.slane %v666, 0
        %v670 = vadd.f32 %v659, %v668
        %v671 = vadd.f32 %v660, %v668
        %v672 = vadd.f32 %v661, %v668
        %v673 = vadd.f32 %v662, %v668
        %v674 = vadd.f32 %v663, %v668
        %v675 = vadd.f32 %v664, %v668
        %v676 = vadd.f32 %v665, %v668
        %677 = vst [vmem:[%s284] sm:$0xff] %v670
        %678 = vst [vmem:[%s284 + $0x8] sm:$0xff] %v671
        %679 = vst [vmem:[%s284 + $0x10] sm:$0xff] %v672
        %680 = vst [vmem:[%s284 + $0x18] sm:$0xff] %v673
        %681 = vst [vmem:[%s284 + $0x20] sm:$0xff] %v674
        %682 = vst [vmem:[%s284 + $0x28] sm:$0xff] %v675
        %683 = vst [vmem:[%s284 + $0x30] sm:$0xff] %v676
        %s684 = sand.u32 %s181, 1
        %s685 = scalar_lea.sflag [#allocation3], %s684
        %s686 = sand.u32 %s181, 1
        %s687 = smul.addr %s686, 56
        %s688 = scalar_lea.vmem [#allocation2], %s687
        // Predicated region
        $region49: #{tpu_custom_call.1} parent=47 // pred_check
          %p689 = pneg %p191
        $region50: #{tpu_custom_call.1} parent=47 // pred_check_branch
          %691 = sbr.rel (%p689) target = $region52
        $region51: #{tpu_custom_call.1} parent=47 // pred_region
          %s692 = smul.u32 7, %s21
          %s693 = ssub.s32 25, %s692
          %p694 = scmp.lt.s32.totalorder %s693, 7
          %s695 = scalar_select %p694, %s693, 7
          %s696 = smul.u32 8, %s695
          %s697 = ssub.s32 56, %s696
          %s698 = sshll.u32 %s697, 4
          %699 = vsyncadd %s685, %s698
          %p700 = scmp.ne.s32.totalorder 0, %s696
          %s701 = smul.addr %s692, 8
          %s702 = scalar_lea.hbm %s7, %s701
          %s703 = smul.u32 8, %s695
          %s704 = sshll.u32 %s688, 4
          %s705 = int_to_ptr.vmem [resolvable:$true] %s704
          %s706 = sshll.u32 %s702, 4
          %s707 = int_to_ptr.hbm [resolvable:$true] %s706
          %s708 = sshll.u32 %s703, 4
          %712 = dma.vmem_to_hbm [thread:$0]  (%p700), %s705, %s708, %s707, %s685, 128, 128, 8
        $region52: #{tpu_custom_call.1} parent=47 // pred_fallthru
          _
      $region48: #{tpu_custom_call.1} parent=5 // pred_fallthru
        _
      %p713 = scmp.le.s32.totalorder 2, %s16
      // Predicated region
      $region53: #{tpu_custom_call.1} parent=5 // pred_check
        %p714 = pneg %p713
      $region54: #{tpu_custom_call.1} parent=5 // pred_check_branch
        %716 = sbr.rel (%p714) target = $region56
      $region55: #{tpu_custom_call.1} parent=5 // pred_region
        %s717 = ssub.s32 %s16, 2
        // Predicated region
        $region57: #{tpu_custom_call.1} parent=55 // pred_check
          %p718 = pneg %p197
        $region58: #{tpu_custom_call.1} parent=55 // pred_check_branch
          %720 = sbr.rel (%p718) target = $region60
        $region59: #{tpu_custom_call.1} parent=55 // pred_region
          %s721 = sand.u32 %s182, 1
          %s722 = scalar_lea.sflag [#allocation3], %s721
          %s723 = sand.u32 %s182, 1
          %s724 = smul.addr %s723, 56
          %s725 = scalar_lea.vmem [#allocation2], %s724
          %727 = dma.done %s722, 896
        $region60: #{tpu_custom_call.1} parent=55 // pred_fallthru
          _
      $region56: #{tpu_custom_call.1} parent=5 // pred_fallthru
        _
    $region6: #{tpu_custom_call.1} parent=1 // loop_footer
      %s20 = sadd.s32 1, %s16
    $region7: #{tpu_custom_call.1} parent=1 // loop_footer_branch
      %15 = sbr.rel target = $region3
    $region8: #{tpu_custom_call.1} parent=1 // loop_exit
      _
    %728 = vsyncpa [#allocation3], 1
    %s729 = scalar_lea.sflag [#allocation3], 1
    %730 = vsyncpa %s729, 1

</llo_original>
